<compile_context>
chip_gen: v6e
topology: v6e:2x2x1
jax: 0.10.0
libtpu: 0.0.40
codegen_flags: <defaults>
</compile_context>

<pallas_src>
import functools
import math

import jax
import jax.numpy as jnp
from jax import lax
from jax.experimental import pallas as pl
from jax.experimental.pallas import tpu as pltpu


def _round_up(x: int, m: int) -> int:
    return (x + m - 1) // m * m


def _token_embedding_kernel(tok_ref, tab_ref, out_ref, *, tv, scale):
    # tok_ref: (1, T) int32   — token ids of this token block.
    # tab_ref: (TV, E_pad)    — vocab slice j of the (zero-padded) table.
    # out_ref: (T, E_pad) f32 — resident accumulator across the vocab axis.
    j = pl.program_id(1)

    @pl.when(j == 0)
    def _init():
        out_ref[...] = jnp.zeros_like(out_ref)

    tok = tok_ref[...]                                              # (1, T)
    row_ids = lax.broadcasted_iota(jnp.int32, (tv, tok.shape[1]), 0) + j * tv
    onehot = (tok == row_ids).astype(tab_ref.dtype)                 # (TV, T)

    # (TV, T) contracted with (TV, E_pad) over dim 0 -> (T, E_pad):
    # one-hot row selection executed on the MXU.
    out_ref[...] += lax.dot_general(
        onehot,
        tab_ref[...],
        dimension_numbers=(((0,), (0,)), ((), ())),
        preferred_element_type=jnp.float32,
        precision=lax.Precision.HIGHEST,
    )

    @pl.when(j == pl.num_programs(1) - 1)
    def _finalize():
        out_ref[...] = out_ref[...] * scale


def token_embedding(tokens, emb_table, *, tokens_per_block=128,
                    vocab_block_bytes=2 * 1024 * 1024):
    """tokens: (S, B) int; emb_table: (V, E) -> (S, B, E) f32."""
    S, B = tokens.shape
    V, E = emb_table.shape
    N = S * B
    scale = math.sqrt(E)  # scale by sqrt of the *original* emb_size

    T = tokens_per_block                      # tokens per grid step (mult. of 8)
    E_pad = _round_up(E, 128)                 # lane-dense output
    V_pad = _round_up(V, 128)                 # MXU-aligned contraction dim
    N_pad = _round_up(N, T)

    # Vocab tile: MXU-aligned, bounded VMEM footprint per block.
    itemsize = jnp.dtype(emb_table.dtype).itemsize
    tv = max(128, (vocab_block_bytes // (E_pad * itemsize)) // 128 * 128)
    TV = min(V_pad, tv)
    V_pad = _round_up(V_pad, TV)

    nb_tok = N_pad // T
    nb_voc = V_pad // TV

    tok_flat = tokens.reshape(N).astype(jnp.int32)
    tok_blocks = jnp.pad(tok_flat, (0, N_pad - N)).reshape(nb_tok, T)
    tab_pad = jnp.pad(emb_table, ((0, V_pad - V), (0, E_pad - E)))

    out_padded = pl.pallas_call(
        functools.partial(_token_embedding_kernel, tv=TV, scale=scale),
        out_shape=jax.ShapeDtypeStruct((N_pad, E_pad), jnp.float32),
        grid_spec=pltpu.PrefetchScalarGridSpec(
            num_scalar_prefetch=0,
            grid=(nb_tok, nb_voc),
            in_specs=[
                pl.BlockSpec((1, T), lambda i, j: (i, 0)),          # tokens
                pl.BlockSpec((TV, E_pad), lambda i, j: (j, 0)),     # table slice
            ],
            out_specs=pl.BlockSpec((T, E_pad), lambda i, j: (i, 0)),
        ),
        compiler_params=pltpu.CompilerParams(
            dimension_semantics=("parallel", "arbitrary"),
        ),
    )(tok_blocks, tab_pad)

    return out_padded[:N, :E].reshape(S, B, E)


if __name__ == "__main__":
    # Module hyper-params (small, consistent with TokenEmbedding.__init__).
    vocab_size = 64
    emb_size = 32
    seq_len = 8
    batch = 2

    key = jax.random.PRNGKey(0)
    k_emb, k_tok = jax.random.split(key)

    # nn.Embedding default init: weight ~ N(0, 1); deterministic here.
    emb_table = jax.random.normal(k_emb, (vocab_size, emb_size), dtype=jnp.float32)
    tokens = jax.random.randint(k_tok, (seq_len, batch), 0, vocab_size, dtype=jnp.int32)

    out = token_embedding(tokens, emb_table)
    out = jax.block_until_ready(out)

    # Pure-JAX reference check of the forward semantics.
    ref = emb_table[tokens] * math.sqrt(emb_size)
    assert out.shape == (seq_len, batch, emb_size)
    assert out.dtype == jnp.float32
    assert jnp.allclose(out, ref, atol=1e-5, rtol=1e-5), "mismatch vs reference"

    print("KERNEL_OK")
</pallas_src>

<mosaic_0001>
module attributes {stable_mosaic.version = 11 : i64} {
  func.func @_token_embedding_kernel(%arg0: i32, %arg1: i32, %arg2: memref<1x128xi32, #tpu.memory_space<vmem>>, %arg3: memref<128x128xf32, #tpu.memory_space<vmem>>, %arg4: memref<128x128xf32, #tpu.memory_space<vmem>>) attributes {dimension_semantics = [#tpu.dimension_semantics<parallel>, #tpu.dimension_semantics<arbitrary>], iteration_bounds = array<i64: 1, 1>, scalar_prefetch = 0 : i64, scratch_operands = 0 : i64, tpu.core_type = #tpu.core_type<tc>, window_params = [{transform_indices = @transform_0, window_bounds = array<i64: 1, 128>}, {transform_indices = @transform_1, window_bounds = array<i64: 128, 128>}, {transform_indices = @transform_2, window_bounds = array<i64: 128, 128>}]} {
    %c0_i32 = arith.constant 0 : i32
    %0 = arith.cmpi eq, %arg1, %c0_i32 : i32
    %1 = arith.extui %0 : i1 to i32
    %c0_i32_0 = arith.constant 0 : i32
    %2 = arith.cmpi ne, %1, %c0_i32_0 : i32
    scf.if %2 {
      %cst_10 = arith.constant 0.000000e+00 : f32
      %20 = vector.broadcast %cst_10 : f32 to vector<128x128xf32>
      %c0_11 = arith.constant 0 : index
      %c0_12 = arith.constant 0 : index
      %21 = vector.load %arg4[%c0_11, %c0_12] : memref<128x128xf32, #tpu.memory_space<vmem>>, vector<128x128xf32>
      tpu.vector_store %arg4[%c0_11, %c0_12], %20 {strides = array<i32>} : memref<128x128xf32, #tpu.memory_space<vmem>>, vector<128x128xf32>,
    } else {
    }
    %c0 = arith.constant 0 : index
    %c0_1 = arith.constant 0 : index
    %3 = vector.load %arg2[%c0, %c0_1] : memref<1x128xi32, #tpu.memory_space<vmem>>, vector<1x128xi32>
    %4 = tpu.iota {dimensions = array<i32: 0>} : vector<128x128xi32>
    %c128_i32 = arith.constant 128 : i32
    %5 = arith.muli %arg1, %c128_i32 : i32
    %6 = vector.broadcast %5 : i32 to vector<128x128xi32>
    %7 = arith.addi %4, %6 : vector<128x128xi32>
    %8 = vector.broadcast %3 : vector<1x128xi32> to vector<128x128xi32>
    %9 = arith.cmpi eq, %8, %7 : vector<128x128xi32>
    %10 = arith.extui %9 : vector<128x128xi1> to vector<128x128xi32>
    %11 = arith.sitofp %10 : vector<128x128xi32> to vector<128x128xf32>
    %c0_2 = arith.constant 0 : index
    %c0_3 = arith.constant 0 : index
    %12 = vector.load %arg4[%c0_2, %c0_3] : memref<128x128xf32, #tpu.memory_space<vmem>>, vector<128x128xf32>
    %c0_4 = arith.constant 0 : index
    %c0_5 = arith.constant 0 : index
    %13 = vector.load %arg3[%c0_4, %c0_5] : memref<128x128xf32, #tpu.memory_space<vmem>>, vector<128x128xf32>
    %cst = arith.constant dense<0.000000e+00> : vector<128x128xf32>
    %14 = tpu.matmul %11, %13, %cst {dimension_numbers = #tpu.dot_dimension_numbers<[0], [0], [1], [1], [0, 1, 1, 1], [], []>, precision = #tpu.contract_precision<fp32>} : vector<128x128xf32>, vector<128x128xf32>, vector<128x128xf32> -> vector<128x128xf32>
    %15 = arith.addf %12, %14 : vector<128x128xf32>
    %c0_6 = arith.constant 0 : index
    %c0_7 = arith.constant 0 : index
    %16 = vector.load %arg4[%c0_6, %c0_7] : memref<128x128xf32, #tpu.memory_space<vmem>>, vector<128x128xf32>
    tpu.vector_store %arg4[%c0_6, %c0_7], %15 {strides = array<i32>} : memref<128x128xf32, #tpu.memory_space<vmem>>, vector<128x128xf32>,
    %c0_i32_8 = arith.constant 0 : i32
    %17 = arith.cmpi eq, %arg1, %c0_i32_8 : i32
    %18 = arith.extui %17 : i1 to i32
    %c0_i32_9 = arith.constant 0 : i32
    %19 = arith.cmpi ne, %18, %c0_i32_9 : i32
    scf.if %19 {
      %c0_10 = arith.constant 0 : index
      %c0_11 = arith.constant 0 : index
      %20 = vector.load %arg4[%c0_10, %c0_11] : memref<128x128xf32, #tpu.memory_space<vmem>>, vector<128x128xf32>
      %cst_12 = arith.constant 5.65685415 : f32
      %21 = vector.broadcast %cst_12 : f32 to vector<128x128xf32>
      %22 = arith.mulf %20, %21 : vector<128x128xf32>
      %c0_13 = arith.constant 0 : index
      %c0_14 = arith.constant 0 : index
      %23 = vector.load %arg4[%c0_13, %c0_14] : memref<128x128xf32, #tpu.memory_space<vmem>>, vector<128x128xf32>
      tpu.vector_store %arg4[%c0_13, %c0_14], %22 {strides = array<i32>} : memref<128x128xf32, #tpu.memory_space<vmem>>, vector<128x128xf32>,
    } else {
    }
    return
  }
  func.func @transform_0(%arg0: i32, %arg1: i32) -> (i32, i32) {
    %c0_i32 = arith.constant 0 : i32
    %c0_i32_0 = arith.constant 0 : i32
    return %arg0, %c0_i32 : i32, i32
  }
  func.func @transform_1(%arg0: i32, %arg1: i32) -> (i32, i32) {
    %c0_i32 = arith.constant 0 : i32
    %c0_i32_0 = arith.constant 0 : i32
    return %arg1, %c0_i32 : i32, i32
  }
  func.func @transform_2(%arg0: i32, %arg1: i32) -> (i32, i32) {
    %c0_i32 = arith.constant 0 : i32
    %c0_i32_0 = arith.constant 0 : i32
    return %arg0, %c0_i32 : i32, i32
  }
}

</mosaic_0001>

<llo_original>
// kernel: tpu_custom_call.1
$region0: #{tpu_custom_call.1}
  #allocation0 [shape = 'u32[]', space=smem, size = 0x4, offset = 0x4, fixed_abs, tag = 'smem constant byte address 0x4 - core index']
  #allocation1 [shape = 'u32[144,128]{1,0:T(1,128)}', space=vmem, size = 0x12000, scoped, tag = 'internal scratch']
  %s0 = inlined_call_operand.hbm [shape: s32[1,128], index: 0, kind: input, shape index: {}]
  %s1 = inlined_call_operand.hbm [shape: f32[128,128], index: 1, kind: input, shape index: {}]
  %s2 = inlined_call_operand.hbm [shape: f32[128,128], index: 2, kind: output, shape index: {}]
  %s3 = sld [smem:[#allocation0]]
  $region34: #{tpu_custom_call.1} parent=0
    _
  %s5 = ssub.s32 1, %s3
  %s6 = scalar_select 0, %s5, %s3
  $region1: #{tpu_custom_call.1} parent=0
    #allocation2 [shape = 'u8[512]{0}', space=vmem, size = 0x400, scoped, tag = 'input window, operand 0, single buffered']
    #allocation3 [shape = 's32[1]{0}', space=sflag, size = 0x4, scoped, tag = 'scoped memory for tpu_custom_call.1']
    #allocation4 [shape = 's32[1]{0}', space=sflag, size = 0x4, scoped, tag = 'scoped memory for tpu_custom_call.1']
    #allocation5 [shape = 'u8[65536]{0}', space=vmem, size = 0x10000, scoped, tag = 'input window, operand 1, single buffered']
    #allocation6 [shape = 's32[1]{0}', space=sflag, size = 0x4, scoped, tag = 'scoped memory for tpu_custom_call.1']
    #allocation7 [shape = 'u8[65536]{0}', space=vmem, size = 0x10000, scoped, tag = 'output window, operand 0, single buffered']
    %7 = vsyncpa [#allocation3], 0
    %8 = vsyncpa [#allocation6], 0
    %9 = vsyncpa [#allocation4], 0
    // Predicated region
    $region2: #{tpu_custom_call.1} parent=1 // pred_check
      _
    $region3: #{tpu_custom_call.1} parent=1 // pred_check_branch
      %11 = sbr.rel (0) target = $region5
    $region4: #{tpu_custom_call.1} parent=1 // pred_region
      %s13 = ssub.s32 16, 16
      %14 = vsyncadd [#allocation3], %s13
      %s16 = sshll.u32 [#allocation2], 4
      %s17 = int_to_ptr.vmem [resolvable:$true] %s16
      %19 = dma.hbm_to_vmem [thread:$0]  %s0, 16, %s17, [#allocation3]
    $region5: #{tpu_custom_call.1} parent=1 // pred_fallthru
      _
    // Predicated region
    $region6: #{tpu_custom_call.1} parent=1 // pred_check
      _
    $region7: #{tpu_custom_call.1} parent=1 // pred_check_branch
      %21 = sbr.rel (0) target = $region9
    $region8: #{tpu_custom_call.1} parent=1 // pred_region
      %s23 = ssub.s32 2048, 2048
      %24 = vsyncadd [#allocation6], %s23
      %s25 = sshll.u32 [#allocation5], 4
      %s26 = int_to_ptr.vmem [resolvable:$true] %s25
      %31 = dma.hbm_to_vmem [thread:$0]  %s1, 2048, %s26, [#allocation6], 128, 128, 8
    $region9: #{tpu_custom_call.1} parent=1 // pred_fallthru
      _
    // Predicated region
    $region10: #{tpu_custom_call.1} parent=1 // pred_check
      _
    $region11: #{tpu_custom_call.1} parent=1 // pred_check_branch
      %33 = sbr.rel (0) target = $region13
    $region12: #{tpu_custom_call.1} parent=1 // pred_region
      %34 = dma.done [#allocation3], 16
    $region13: #{tpu_custom_call.1} parent=1 // pred_fallthru
      _
    // Predicated region
    $region14: #{tpu_custom_call.1} parent=1 // pred_check
      _
    $region15: #{tpu_custom_call.1} parent=1 // pred_check_branch
      %36 = sbr.rel (0) target = $region17
    $region16: #{tpu_custom_call.1} parent=1 // pred_region
      %37 = dma.done [#allocation6], 2048
    $region17: #{tpu_custom_call.1} parent=1 // pred_fallthru
      _
    %p38 = scmp.eq.s32.totalorder 0, 0
    // Predicated region
    $region18: #{tpu_custom_call.1} parent=1 // pred_check
      %p39 = pneg %p38
    $region19: #{tpu_custom_call.1} parent=1 // pred_check_branch
      %41 = sbr.rel (%p39) target = $region21
    $region20: #{tpu_custom_call.1} parent=1 // pred_region
      %42 = vst [vmem:[#allocation7] sm:$0xff] 0.0
      %43 = vst [vmem:[#allocation7 + $0x8] sm:$0xff] 0.0
      %44 = vst [vmem:[#allocation7 + $0x10] sm:$0xff] 0.0
      %45 = vst [vmem:[#allocation7 + $0x18] sm:$0xff] 0.0
      %46 = vst [vmem:[#allocation7 + $0x20] sm:$0xff] 0.0
      %47 = vst [vmem:[#allocation7 + $0x28] sm:$0xff] 0.0
      %48 = vst [vmem:[#allocation7 + $0x30] sm:$0xff] 0.0
      %49 = vst [vmem:[#allocation7 + $0x38] sm:$0xff] 0.0
      %50 = vst [vmem:[#allocation7 + $0x40] sm:$0xff] 0.0
      %51 = vst [vmem:[#allocation7 + $0x48] sm:$0xff] 0.0
      %52 = vst [vmem:[#allocation7 + $0x50] sm:$0xff] 0.0
      %53 = vst [vmem:[#allocation7 + $0x58] sm:$0xff] 0.0
      %54 = vst [vmem:[#allocation7 + $0x60] sm:$0xff] 0.0
      %55 = vst [vmem:[#allocation7 + $0x68] sm:$0xff] 0.0
      %56 = vst [vmem:[#allocation7 + $0x70] sm:$0xff] 0.0
      %57 = vst [vmem:[#allocation7 + $0x78] sm:$0xff] 0.0
    $region21: #{tpu_custom_call.1} parent=1 // pred_fallthru
      _
    %v58 = vld [vmem:[#allocation2] sm:$0x1]
    %v59 = vlaneseq
    %v60 = vshrl.u32 %v59, 7
    %v61 = vadd.s32 %v60, 8
    %v62 = vadd.s32 %v60, 16
    %v63 = vadd.s32 %v60, 24
    %v64 = vadd.s32 %v60, 32
    %v65 = vadd.s32 %v60, 40
    %v66 = vadd.s32 %v60, 48
    %v67 = vadd.s32 %v60, 56
    %v68 = vadd.s32 %v60, 64
    %v69 = vadd.s32 %v60, 72
    %v70 = vadd.s32 %v60, 80
    %v71 = vadd.s32 %v60, 88
    %v72 = vadd.s32 %v60, 96
    %v73 = vadd.s32 %v60, 104
    %v74 = vadd.s32 %v60, 112
    %v75 = vadd.s32 %v60, 120
    %s76 = smul.u32 0, 128
    %v77 = vstv %s76
    %v78 = vadd.s32 %v60, %v77
    %v79 = vadd.s32 %v61, %v77
    %v80 = vadd.s32 %v62, %v77
    %v81 = vadd.s32 %v63, %v77
    %v82 = vadd.s32 %v64, %v77
    %v83 = vadd.s32 %v65, %v77
    %v84 = vadd.s32 %v66, %v77
    %v85 = vadd.s32 %v67, %v77
    %v86 = vadd.s32 %v68, %v77
    %v87 = vadd.s32 %v69, %v77
    %v88 = vadd.s32 %v70, %v77
    %v89 = vadd.s32 %v71, %v77
    %v90 = vadd.s32 %v72, %v77
    %v91 = vadd.s32 %v73, %v77
    %v92 = vadd.s32 %v74, %v77
    %v93 = vadd.s32 %v75, %v77
    %v94 = vlaneseq
    %v95 = vshrl.u32 %v94, 7
    %v96 = vsub.s32 0, %v95
    %v97 = vrot.slane %v58, %v96
    %vm98 = vcmp.eq.s32.totalorder %v97, %v78
    %vm99 = vcmp.eq.s32.totalorder %v97, %v79
    %vm100 = vcmp.eq.s32.totalorder %v97, %v80
    %vm101 = vcmp.eq.s32.totalorder %v97, %v81
    %vm102 = vcmp.eq.s32.totalorder %v97, %v82
    %vm103 = vcmp.eq.s32.totalorder %v97, %v83
    %vm104 = vcmp.eq.s32.totalorder %v97, %v84
    %vm105 = vcmp.eq.s32.totalorder %v97, %v85
    %vm106 = vcmp.eq.s32.totalorder %v97, %v86
    %vm107 = vcmp.eq.s32.totalorder %v97, %v87
    %vm108 = vcmp.eq.s32.totalorder %v97, %v88
    %vm109 = vcmp.eq.s32.totalorder %v97, %v89
    %vm110 = vcmp.eq.s32.totalorder %v97, %v90
    %vm111 = vcmp.eq.s32.totalorder %v97, %v91
    %vm112 = vcmp.eq.s32.totalorder %v97, %v92
    %vm113 = vcmp.eq.s32.totalorder %v97, %v93
    %v114 = vsel %vm98, 1, 0
    %v115 = vsel %vm99, 1, 0
    %v116 = vsel %vm100, 1, 0
    %v117 = vsel %vm101, 1, 0
    %v118 = vsel %vm102, 1, 0
    %v119 = vsel %vm103, 1, 0
    %v120 = vsel %vm104, 1, 0
    %v121 = vsel %vm105, 1, 0
    %v122 = vsel %vm106, 1, 0
    %v123 = vsel %vm107, 1, 0
    %v124 = vsel %vm108, 1, 0
    %v125 = vsel %vm109, 1, 0
    %v126 = vsel %vm110, 1, 0
    %v127 = vsel %vm111, 1, 0
    %v128 = vsel %vm112, 1, 0
    %v129 = vsel %vm113, 1, 0
    %v130 = vcvt.s32.f32 %v114
    %v131 = vcvt.s32.f32 %v115
    %v132 = vcvt.s32.f32 %v116
    %v133 = vcvt.s32.f32 %v117
    %v134 = vcvt.s32.f32 %v118
    %v135 = vcvt.s32.f32 %v119
    %v136 = vcvt.s32.f32 %v120
    %v137 = vcvt.s32.f32 %v121
    %v138 = vcvt.s32.f32 %v122
    %v139 = vcvt.s32.f32 %v123
    %v140 = vcvt.s32.f32 %v124
    %v141 = vcvt.s32.f32 %v125
    %v142 = vcvt.s32.f32 %v126
    %v143 = vcvt.s32.f32 %v127
    %v144 = vcvt.s32.f32 %v128
    %v145 = vcvt.s32.f32 %v129
    %v146 = vld [vmem:[#allocation7] sm:$0xff]
    %v147 = vld [vmem:[#allocation7 + $0x8] sm:$0xff]
    %v148 = vld [vmem:[#allocation7 + $0x10] sm:$0xff]
    %v149 = vld [vmem:[#allocation7 + $0x18] sm:$0xff]
    %v150 = vld [vmem:[#allocation7 + $0x20] sm:$0xff]
    %v151 = vld [vmem:[#allocation7 + $0x28] sm:$0xff]
    %v152 = vld [vmem:[#allocation7 + $0x30] sm:$0xff]
    %v153 = vld [vmem:[#allocation7 + $0x38] sm:$0xff]
    %v154 = vld [vmem:[#allocation7 + $0x40] sm:$0xff]
    %v155 = vld [vmem:[#allocation7 + $0x48] sm:$0xff]
    %v156 = vld [vmem:[#allocation7 + $0x50] sm:$0xff]
    %v157 = vld [vmem:[#allocation7 + $0x58] sm:$0xff]
    %v158 = vld [vmem:[#allocation7 + $0x60] sm:$0xff]
    %v159 = vld [vmem:[#allocation7 + $0x68] sm:$0xff]
    %v160 = vld [vmem:[#allocation7 + $0x70] sm:$0xff]
    %v161 = vld [vmem:[#allocation7 + $0x78] sm:$0xff]
    %v162 = vld [vmem:[#allocation5] sm:$0xff]
    %v163 = vld [vmem:[#allocation5 + $0x8] sm:$0xff]
    %v164 = vld [vmem:[#allocation5 + $0x10] sm:$0xff]
    %v165 = vld [vmem:[#allocation5 + $0x18] sm:$0xff]
    %v166 = vld [vmem:[#allocation5 + $0x20] sm:$0xff]
    %v167 = vld [vmem:[#allocation5 + $0x28] sm:$0xff]
    %v168 = vld [vmem:[#allocation5 + $0x30] sm:$0xff]
    %v169 = vld [vmem:[#allocation5 + $0x38] sm:$0xff]
    %v170 = vld [vmem:[#allocation5 + $0x40] sm:$0xff]
    %v171 = vld [vmem:[#allocation5 + $0x48] sm:$0xff]
    %v172 = vld [vmem:[#allocation5 + $0x50] sm:$0xff]
    %v173 = vld [vmem:[#allocation5 + $0x58] sm:$0xff]
    %v174 = vld [vmem:[#allocation5 + $0x60] sm:$0xff]
    %v175 = vld [vmem:[#allocation5 + $0x68] sm:$0xff]
    %v176 = vld [vmem:[#allocation5 + $0x70] sm:$0xff]
    %v177 = vld [vmem:[#allocation5 + $0x78] sm:$0xff]
    %178 = vxpose.xlu0.b32.start [1/16] %v130, 128
    %179 = vxpose.xlu0.b32.cont [2/16] %v131, 128
    %180 = vxpose.xlu0.b32.cont [3/16] %v132, 128
    %181 = vxpose.xlu0.b32.cont [4/16] %v133, 128
    %182 = vxpose.xlu0.b32.cont [5/16] %v134, 128
    %183 = vxpose.xlu0.b32.cont [6/16] %v135, 128
    %184 = vxpose.xlu0.b32.cont [7/16] %v136, 128
    %185 = vxpose.xlu0.b32.cont [8/16] %v137, 128
    %186 = vxpose.xlu0.b32.cont [9/16] %v138, 128
    %187 = vxpose.xlu0.b32.cont [10/16] %v139, 128
    %188 = vxpose.xlu0.b32.cont [11/16] %v140, 128
    %189 = vxpose.xlu0.b32.cont [12/16] %v141, 128
    %190 = vxpose.xlu0.b32.cont [13/16] %v142, 128
    %191 = vxpose.xlu0.b32.cont [14/16] %v143, 128
    %192 = vxpose.xlu0.b32.cont [15/16] %v144, 128
    %193 = vxpose.xlu0.b32.end [16/16] %v145, 128
    %v194 = vpop.trf.xlu0
    %v195 = vpop.trf.xlu0
    %v196 = vpop.trf.xlu0
    %v197 = vpop.trf.xlu0
    %v198 = vpop.trf.xlu0
    %v199 = vpop.trf.xlu0
    %v200 = vpop.trf.xlu0
    %v201 = vpop.trf.xlu0
    %v202 = vpop.trf.xlu0
    %v203 = vpop.trf.xlu0
    %v204 = vpop.trf.xlu0
    %v205 = vpop.trf.xlu0
    %v206 = vpop.trf.xlu0
    %v207 = vpop.trf.xlu0
    %v208 = vpop.trf.xlu0
    %v209 = vpop.trf.xlu0
    %210 = vmatprep.subr.mxu0 0.0
    %v211 = vand.u32 %v177, 4294901760
    %212 = vmatpush1.msra.mxu0 %v211
    %213 = vmatprep.subr.mxu0 0.0
    %v214 = vand.u32 %v176, 4294901760
    %215 = vmatpush1.msra.mxu0 %v214
    %216 = vmatprep.subr.mxu0 0.0
    %v217 = vand.u32 %v175, 4294901760
    %218 = vmatpush1.msra.mxu0 %v217
    %219 = vmatprep.subr.mxu0 0.0
    %v220 = vand.u32 %v174, 4294901760
    %221 = vmatpush1.msra.mxu0 %v220
    %222 = vmatprep.subr.mxu0 0.0
    %v223 = vand.u32 %v173, 4294901760
    %224 = vmatpush1.msra.mxu0 %v223
    %225 = vmatprep.subr.mxu0 0.0
    %v226 = vand.u32 %v172, 4294901760
    %227 = vmatpush1.msra.mxu0 %v226
    %228 = vmatprep.subr.mxu0 0.0
    %v229 = vand.u32 %v171, 4294901760
    %230 = vmatpush1.msra.mxu0 %v229
    %231 = vmatprep.subr.mxu0 0.0
    %v232 = vand.u32 %v170, 4294901760
    %233 = vmatpush1.msra.mxu0 %v232
    %234 = vmatprep.subr.mxu0 0.0
    %v235 = vand.u32 %v169, 4294901760
    %236 = vmatpush1.msra.mxu0 %v235
    %237 = vmatprep.subr.mxu0 0.0
    %v238 = vand.u32 %v168, 4294901760
    %239 = vmatpush1.msra.mxu0 %v238
    %240 = vmatprep.subr.mxu0 0.0
    %v241 = vand.u32 %v167, 4294901760
    %242 = vmatpush1.msra.mxu0 %v241
    %243 = vmatprep.subr.mxu0 0.0
    %v244 = vand.u32 %v166, 4294901760
    %245 = vmatpush1.msra.mxu0 %v244
    %246 = vmatprep.subr.mxu0 0.0
    %v247 = vand.u32 %v165, 4294901760
    %248 = vmatpush1.msra.mxu0 %v247
    %249 = vmatprep.subr.mxu0 0.0
    %v250 = vand.u32 %v164, 4294901760
    %251 = vmatpush1.msra.mxu0 %v250
    %252 = vmatprep.subr.mxu0 0.0
    %v253 = vand.u32 %v163, 4294901760
    %254 = vmatpush1.msra.mxu0 %v253
    %255 = vmatprep.subr.mxu0 0.0
    %v256 = vand.u32 %v162, 4294901760
    %257 = vmatpush1.msra.mxu0 %v256
    %258 = vmatprep.subr.mxu0 0.0
    %259 = vmatpush2.msra.mxu0 0.0
    %260 = vmatprep.subr.mxu0 0.0
    %261 = vmatpush2.msra.mxu0 0.0
    %262 = vmatprep.subr.mxu0 0.0
    %263 = vmatpush2.msra.mxu0 0.0
    %264 = vmatprep.subr.mxu0 0.0
    %265 = vmatpush2.msra.mxu0 0.0
    %266 = vmatprep.subr.mxu0 0.0
    %267 = vmatpush2.msra.mxu0 0.0
    %268 = vmatprep.subr.mxu0 0.0
    %269 = vmatpush2.msra.mxu0 0.0
    %270 = vmatprep.subr.mxu0 0.0
    %271 = vmatpush2.msra.mxu0 0.0
    %272 = vmatprep.subr.mxu0 0.0
    %273 = vmatpush2.msra.mxu0 0.0
    %274 = vmatprep.subr.mxu0 0.0
    %275 = vmatpush2.msra.mxu0 0.0
    %276 = vmatprep.subr.mxu0 0.0
    %277 = vmatpush2.msra.mxu0 0.0
    %278 = vmatprep.subr.mxu0 0.0
    %279 = vmatpush2.msra.mxu0 0.0
    %280 = vmatprep.subr.mxu0 0.0
    %281 = vmatpush2.msra.mxu0 0.0
    %282 = vmatprep.subr.mxu0 0.0
    %283 = vmatpush2.msra.mxu0 0.0
    %284 = vmatprep.subr.mxu0 0.0
    %285 = vmatpush2.msra.mxu0 0.0
    %286 = vmatprep.subr.mxu0 0.0
    %287 = vmatpush2.msra.mxu0 0.0
    %288 = vmatprep.subr.mxu0 0.0
    %289 = vmatpush2.msra.mxu0 0.0
    %290 = vmatprep.mubr.f32.mxu0 0.0
    %v291 = vand.u32 %v194, 4294901760
    %v292 = vsub.f32 %v194, %v291
    %v293 = vand.u32 %v292, 4294901760
    %v294 = vsub.f32 %v292, %v293
    %v295 = vand.u32 %v294, 4294901760
    %296 = vmatmul.mubr.f32.gmra.mxu0 %v295
    %v297 = vpop.f32.mrf.mxu0
    %v298 = vadd.f32 0.0, %v297
    %v299 = vpop.f32.mrf.mxu0
    %300 = vmatprep.mubr.f32.mxu0 0.0
    %v301 = vand.u32 %v195, 4294901760
    %v302 = vsub.f32 %v195, %v301
    %v303 = vand.u32 %v302, 4294901760
    %v304 = vsub.f32 %v302, %v303
    %v305 = vand.u32 %v304, 4294901760
    %306 = vmatmul.mubr.f32.gmra.mxu0 %v305
    %v307 = vpop.f32.mrf.mxu0
    %v308 = vadd.f32 0.0, %v307
    %v309 = vpop.f32.mrf.mxu0
    %310 = vmatprep.mubr.f32.mxu0 0.0
    %v311 = vand.u32 %v196, 4294901760
    %v312 = vsub.f32 %v196, %v311
    %v313 = vand.u32 %v312, 4294901760
    %v314 = vsub.f32 %v312, %v313
    %v315 = vand.u32 %v314, 4294901760
    %316 = vmatmul.mubr.f32.gmra.mxu0 %v315
    %v317 = vpop.f32.mrf.mxu0
    %v318 = vadd.f32 0.0, %v317
    %v319 = vpop.f32.mrf.mxu0
    %320 = vmatprep.mubr.f32.mxu0 0.0
    %v321 = vand.u32 %v197, 4294901760
    %v322 = vsub.f32 %v197, %v321
    %v323 = vand.u32 %v322, 4294901760
    %v324 = vsub.f32 %v322, %v323
    %v325 = vand.u32 %v324, 4294901760
    %326 = vmatmul.mubr.f32.gmra.mxu0 %v325
    %v327 = vpop.f32.mrf.mxu0
    %v328 = vadd.f32 0.0, %v327
    %v329 = vpop.f32.mrf.mxu0
    %330 = vmatprep.mubr.f32.mxu0 0.0
    %v331 = vand.u32 %v198, 4294901760
    %v332 = vsub.f32 %v198, %v331
    %v333 = vand.u32 %v332, 4294901760
    %v334 = vsub.f32 %v332, %v333
    %v335 = vand.u32 %v334, 4294901760
    %336 = vmatmul.mubr.f32.gmra.mxu0 %v335
    %v337 = vpop.f32.mrf.mxu0
    %v338 = vadd.f32 0.0, %v337
    %v339 = vpop.f32.mrf.mxu0
    %340 = vmatprep.mubr.f32.mxu0 0.0
    %v341 = vand.u32 %v199, 4294901760
    %v342 = vsub.f32 %v199, %v341
    %v343 = vand.u32 %v342, 4294901760
    %v344 = vsub.f32 %v342, %v343
    %v345 = vand.u32 %v344, 4294901760
    %346 = vmatmul.mubr.f32.gmra.mxu0 %v345
    %v347 = vpop.f32.mrf.mxu0
    %v348 = vadd.f32 0.0, %v347
    %v349 = vpop.f32.mrf.mxu0
    %350 = vmatprep.mubr.f32.mxu0 0.0
    %v351 = vand.u32 %v200, 4294901760
    %v352 = vsub.f32 %v200, %v351
    %v353 = vand.u32 %v352, 4294901760
    %v354 = vsub.f32 %v352, %v353
    %v355 = vand.u32 %v354, 4294901760
    %356 = vmatmul.mubr.f32.gmra.mxu0 %v355
    %v357 = vpop.f32.mrf.mxu0
    %v358 = vadd.f32 0.0, %v357
    %v359 = vpop.f32.mrf.mxu0
    %360 = vmatprep.mubr.f32.mxu0 0.0
    %v361 = vand.u32 %v201, 4294901760
    %v362 = vsub.f32 %v201, %v361
    %v363 = vand.u32 %v362, 4294901760
    %v364 = vsub.f32 %v362, %v363
    %v365 = vand.u32 %v364, 4294901760
    %366 = vmatmul.mubr.f32.gmra.mxu0 %v365
    %v367 = vpop.f32.mrf.mxu0
    %v368 = vadd.f32 0.0, %v367
    %v369 = vpop.f32.mrf.mxu0
    %370 = vmatprep.mubr.f32.mxu0 0.0
    %v371 = vand.u32 %v202, 4294901760
    %v372 = vsub.f32 %v202, %v371
    %v373 = vand.u32 %v372, 4294901760
    %v374 = vsub.f32 %v372, %v373
    %v375 = vand.u32 %v374, 4294901760
    %376 = vmatmul.mubr.f32.gmra.mxu0 %v375
    %v377 = vpop.f32.mrf.mxu0
    %v378 = vadd.f32 0.0, %v377
    %v379 = vpop.f32.mrf.mxu0
    %380 = vmatprep.mubr.f32.mxu0 0.0
    %v381 = vand.u32 %v203, 4294901760
    %v382 = vsub.f32 %v203, %v381
    %v383 = vand.u32 %v382, 4294901760
    %v384 = vsub.f32 %v382, %v383
    %v385 = vand.u32 %v384, 4294901760
    %386 = vmatmul.mubr.f32.gmra.mxu0 %v385
    %v387 = vpop.f32.mrf.mxu0
    %v388 = vadd.f32 0.0, %v387
    %v389 = vpop.f32.mrf.mxu0
    %390 = vmatprep.mubr.f32.mxu0 0.0
    %v391 = vand.u32 %v204, 4294901760
    %v392 = vsub.f32 %v204, %v391
    %v393 = vand.u32 %v392, 4294901760
    %v394 = vsub.f32 %v392, %v393
    %v395 = vand.u32 %v394, 4294901760
    %396 = vmatmul.mubr.f32.gmra.mxu0 %v395
    %v397 = vpop.f32.mrf.mxu0
    %v398 = vadd.f32 0.0, %v397
    %v399 = vpop.f32.mrf.mxu0
    %400 = vmatprep.mubr.f32.mxu0 0.0
    %v401 = vand.u32 %v205, 4294901760
    %v402 = vsub.f32 %v205, %v401
    %v403 = vand.u32 %v402, 4294901760
    %v404 = vsub.f32 %v402, %v403
    %v405 = vand.u32 %v404, 4294901760
    %406 = vmatmul.mubr.f32.gmra.mxu0 %v405
    %v407 = vpop.f32.mrf.mxu0
    %v408 = vadd.f32 0.0, %v407
    %v409 = vpop.f32.mrf.mxu0
    %410 = vmatprep.mubr.f32.mxu0 0.0
    %v411 = vand.u32 %v206, 4294901760
    %v412 = vsub.f32 %v206, %v411
    %v413 = vand.u32 %v412, 4294901760
    %v414 = vsub.f32 %v412, %v413
    %v415 = vand.u32 %v414, 4294901760
    %416 = vmatmul.mubr.f32.gmra.mxu0 %v415
    %v417 = vpop.f32.mrf.mxu0
    %v418 = vadd.f32 0.0, %v417
    %v419 = vpop.f32.mrf.mxu0
    %420 = vmatprep.mubr.f32.mxu0 0.0
    %v421 = vand.u32 %v207, 4294901760
    %v422 = vsub.f32 %v207, %v421
    %v423 = vand.u32 %v422, 4294901760
    %v424 = vsub.f32 %v422, %v423
    %v425 = vand.u32 %v424, 4294901760
    %426 = vmatmul.mubr.f32.gmra.mxu0 %v425
    %v427 = vpop.f32.mrf.mxu0
    %v428 = vadd.f32 0.0, %v427
    %v429 = vpop.f32.mrf.mxu0
    %430 = vmatprep.mubr.f32.mxu0 0.0
    %v431 = vand.u32 %v208, 4294901760
    %v432 = vsub.f32 %v208, %v431
    %v433 = vand.u32 %v432, 4294901760
    %v434 = vsub.f32 %v432, %v433
    %v435 = vand.u32 %v434, 4294901760
    %436 = vmatmul.mubr.f32.gmra.mxu0 %v435
    %v437 = vpop.f32.mrf.mxu0
    %v438 = vadd.f32 0.0, %v437
    %v439 = vpop.f32.mrf.mxu0
    %440 = vmatprep.mubr.f32.mxu0 0.0
    %v441 = vand.u32 %v209, 4294901760
    %v442 = vsub.f32 %v209, %v441
    %v443 = vand.u32 %v442, 4294901760
    %v444 = vsub.f32 %v442, %v443
    %v445 = vand.u32 %v444, 4294901760
    %446 = vmatmul.mubr.f32.gmra.mxu0 %v445
    %v447 = vpop.f32.mrf.mxu0
    %v448 = vadd.f32 0.0, %v447
    %v449 = vpop.f32.mrf.mxu0
    %450 = vdwg.mxu0
    %451 = vmatprep.subr.mxu0 0.0
    %v452 = vand.u32 %v177, 4294901760
    %v453 = vsub.f32 %v177, %v452
    %v454 = vand.u32 %v453, 4294901760
    %v455 = vsub.f32 %v453, %v454
    %v456 = vand.u32 %v455, 4294901760
    %457 = vmatpush1.msra.mxu0 %v456
    %458 = vmatprep.subr.mxu0 0.0
    %v459 = vand.u32 %v176, 4294901760
    %v460 = vsub.f32 %v176, %v459
    %v461 = vand.u32 %v460, 4294901760
    %v462 = vsub.f32 %v460, %v461
    %v463 = vand.u32 %v462, 4294901760
    %464 = vmatpush1.msra.mxu0 %v463
    %465 = vmatprep.subr.mxu0 0.0
    %v466 = vand.u32 %v175, 4294901760
    %v467 = vsub.f32 %v175, %v466
    %v468 = vand.u32 %v467, 4294901760
    %v469 = vsub.f32 %v467, %v468
    %v470 = vand.u32 %v469, 4294901760
    %471 = vmatpush1.msra.mxu0 %v470
    %472 = vmatprep.subr.mxu0 0.0
    %v473 = vand.u32 %v174, 4294901760
    %v474 = vsub.f32 %v174, %v473
    %v475 = vand.u32 %v474, 4294901760
    %v476 = vsub.f32 %v474, %v475
    %v477 = vand.u32 %v476, 4294901760
    %478 = vmatpush1.msra.mxu0 %v477
    %479 = vmatprep.subr.mxu0 0.0
    %v480 = vand.u32 %v173, 4294901760
    %v481 = vsub.f32 %v173, %v480
    %v482 = vand.u32 %v481, 4294901760
    %v483 = vsub.f32 %v481, %v482
    %v484 = vand.u32 %v483, 4294901760
    %485 = vmatpush1.msra.mxu0 %v484
    %486 = vmatprep.subr.mxu0 0.0
    %v487 = vand.u32 %v172, 4294901760
    %v488 = vsub.f32 %v172, %v487
    %v489 = vand.u32 %v488, 4294901760
    %v490 = vsub.f32 %v488, %v489
    %v491 = vand.u32 %v490, 4294901760
    %492 = vmatpush1.msra.mxu0 %v491
    %493 = vmatprep.subr.mxu0 0.0
    %v494 = vand.u32 %v171, 4294901760
    %v495 = vsub.f32 %v171, %v494
    %v496 = vand.u32 %v495, 4294901760
    %v497 = vsub.f32 %v495, %v496
    %v498 = vand.u32 %v497, 4294901760
    %499 = vmatpush1.msra.mxu0 %v498
    %500 = vmatprep.subr.mxu0 0.0
    %v501 = vand.u32 %v170, 4294901760
    %v502 = vsub.f32 %v170, %v501
    %v503 = vand.u32 %v502, 4294901760
    %v504 = vsub.f32 %v502, %v503
    %v505 = vand.u32 %v504, 4294901760
    %506 = vmatpush1.msra.mxu0 %v505
    %507 = vmatprep.subr.mxu0 0.0
    %v508 = vand.u32 %v169, 4294901760
    %v509 = vsub.f32 %v169, %v508
    %v510 = vand.u32 %v509, 4294901760
    %v511 = vsub.f32 %v509, %v510
    %v512 = vand.u32 %v511, 4294901760
    %513 = vmatpush1.msra.mxu0 %v512
    %514 = vmatprep.subr.mxu0 0.0
    %v515 = vand.u32 %v168, 4294901760
    %v516 = vsub.f32 %v168, %v515
    %v517 = vand.u32 %v516, 4294901760
    %v518 = vsub.f32 %v516, %v517
    %v519 = vand.u32 %v518, 4294901760
    %520 = vmatpush1.msra.mxu0 %v519
    %521 = vmatprep.subr.mxu0 0.0
    %v522 = vand.u32 %v167, 4294901760
    %v523 = vsub.f32 %v167, %v522
    %v524 = vand.u32 %v523, 4294901760
    %v525 = vsub.f32 %v523, %v524
    %v526 = vand.u32 %v525, 4294901760
    %527 = vmatpush1.msra.mxu0 %v526
    %528 = vmatprep.subr.mxu0 0.0
    %v529 = vand.u32 %v166, 4294901760
    %v530 = vsub.f32 %v166, %v529
    %v531 = vand.u32 %v530, 4294901760
    %v532 = vsub.f32 %v530, %v531
    %v533 = vand.u32 %v532, 4294901760
    %534 = vmatpush1.msra.mxu0 %v533
    %535 = vmatprep.subr.mxu0 0.0
    %v536 = vand.u32 %v165, 4294901760
    %v537 = vsub.f32 %v165, %v536
    %v538 = vand.u32 %v537, 4294901760
    %v539 = vsub.f32 %v537, %v538
    %v540 = vand.u32 %v539, 4294901760
    %541 = vmatpush1.msra.mxu0 %v540
    %542 = vmatprep.subr.mxu0 0.0
    %v543 = vand.u32 %v164, 4294901760
    %v544 = vsub.f32 %v164, %v543
    %v545 = vand.u32 %v544, 4294901760
    %v546 = vsub.f32 %v544, %v545
    %v547 = vand.u32 %v546, 4294901760
    %548 = vmatpush1.msra.mxu0 %v547
    %549 = vmatprep.subr.mxu0 0.0
    %v550 = vand.u32 %v163, 4294901760
    %v551 = vsub.f32 %v163, %v550
    %v552 = vand.u32 %v551, 4294901760
    %v553 = vsub.f32 %v551, %v552
    %v554 = vand.u32 %v553, 4294901760
    %555 = vmatpush1.msra.mxu0 %v554
    %556 = vmatprep.subr.mxu0 0.0
    %v557 = vand.u32 %v162, 4294901760
    %v558 = vsub.f32 %v162, %v557
    %v559 = vand.u32 %v558, 4294901760
    %v560 = vsub.f32 %v558, %v559
    %v561 = vand.u32 %v560, 4294901760
    %562 = vmatpush1.msra.mxu0 %v561
    %563 = vmatprep.subr.mxu0 0.0
    %564 = vmatpush2.msra.mxu0 0.0
    %565 = vmatprep.subr.mxu0 0.0
    %566 = vmatpush2.msra.mxu0 0.0
    %567 = vmatprep.subr.mxu0 0.0
    %568 = vmatpush2.msra.mxu0 0.0
    %569 = vmatprep.subr.mxu0 0.0
    %570 = vmatpush2.msra.mxu0 0.0
    %571 = vmatprep.subr.mxu0 0.0
    %572 = vmatpush2.msra.mxu0 0.0
    %573 = vmatprep.subr.mxu0 0.0
    %574 = vmatpush2.msra.mxu0 0.0
    %575 = vmatprep.subr.mxu0 0.0
    %576 = vmatpush2.msra.mxu0 0.0
    %577 = vmatprep.subr.mxu0 0.0
    %578 = vmatpush2.msra.mxu0 0.0
    %579 = vmatprep.subr.mxu0 0.0
    %580 = vmatpush2.msra.mxu0 0.0
    %581 = vmatprep.subr.mxu0 0.0
    %582 = vmatpush2.msra.mxu0 0.0
    %583 = vmatprep.subr.mxu0 0.0
    %584 = vmatpush2.msra.mxu0 0.0
    %585 = vmatprep.subr.mxu0 0.0
    %586 = vmatpush2.msra.mxu0 0.0
    %587 = vmatprep.subr.mxu0 0.0
    %588 = vmatpush2.msra.mxu0 0.0
    %589 = vmatprep.subr.mxu0 0.0
    %590 = vmatpush2.msra.mxu0 0.0
    %591 = vmatprep.subr.mxu0 0.0
    %592 = vmatpush2.msra.mxu0 0.0
    %593 = vmatprep.subr.mxu0 0.0
    %594 = vmatpush2.msra.mxu0 0.0
    %595 = vmatprep.mubr.f32.mxu0 0.0
    %v596 = vand.u32 %v194, 4294901760
    %597 = vmatmul.mubr.f32.gmra.mxu0 %v596
    %v598 = vpop.f32.mrf.mxu0
    %v599 = vadd.f32 %v298, %v598
    %v600 = vpop.f32.mrf.mxu0
    %601 = vmatprep.mubr.f32.mxu0 0.0
    %v602 = vand.u32 %v195, 4294901760
    %603 = vmatmul.mubr.f32.gmra.mxu0 %v602
    %v604 = vpop.f32.mrf.mxu0
    %v605 = vadd.f32 %v308, %v604
    %v606 = vpop.f32.mrf.mxu0
    %607 = vmatprep.mubr.f32.mxu0 0.0
    %v608 = vand.u32 %v196, 4294901760
    %609 = vmatmul.mubr.f32.gmra.mxu0 %v608
    %v610 = vpop.f32.mrf.mxu0
    %v611 = vadd.f32 %v318, %v610
    %v612 = vpop.f32.mrf.mxu0
    %613 = vmatprep.mubr.f32.mxu0 0.0
    %v614 = vand.u32 %v197, 4294901760
    %615 = vmatmul.mubr.f32.gmra.mxu0 %v614
    %v616 = vpop.f32.mrf.mxu0
    %v617 = vadd.f32 %v328, %v616
    %v618 = vpop.f32.mrf.mxu0
    %619 = vmatprep.mubr.f32.mxu0 0.0
    %v620 = vand.u32 %v198, 4294901760
    %621 = vmatmul.mubr.f32.gmra.mxu0 %v620
    %v622 = vpop.f32.mrf.mxu0
    %v623 = vadd.f32 %v338, %v622
    %v624 = vpop.f32.mrf.mxu0
    %625 = vmatprep.mubr.f32.mxu0 0.0
    %v626 = vand.u32 %v199, 4294901760
    %627 = vmatmul.mubr.f32.gmra.mxu0 %v626
    %v628 = vpop.f32.mrf.mxu0
    %v629 = vadd.f32 %v348, %v628
    %v630 = vpop.f32.mrf.mxu0
    %631 = vmatprep.mubr.f32.mxu0 0.0
    %v632 = vand.u32 %v200, 4294901760
    %633 = vmatmul.mubr.f32.gmra.mxu0 %v632
    %v634 = vpop.f32.mrf.mxu0
    %v635 = vadd.f32 %v358, %v634
    %v636 = vpop.f32.mrf.mxu0
    %637 = vmatprep.mubr.f32.mxu0 0.0
    %v638 = vand.u32 %v201, 4294901760
    %639 = vmatmul.mubr.f32.gmra.mxu0 %v638
    %v640 = vpop.f32.mrf.mxu0
    %v641 = vadd.f32 %v368, %v640
    %v642 = vpop.f32.mrf.mxu0
    %643 = vmatprep.mubr.f32.mxu0 0.0
    %v644 = vand.u32 %v202, 4294901760
    %645 = vmatmul.mubr.f32.gmra.mxu0 %v644
    %v646 = vpop.f32.mrf.mxu0
    %v647 = vadd.f32 %v378, %v646
    %v648 = vpop.f32.mrf.mxu0
    %649 = vmatprep.mubr.f32.mxu0 0.0
    %v650 = vand.u32 %v203, 4294901760
    %651 = vmatmul.mubr.f32.gmra.mxu0 %v650
    %v652 = vpop.f32.mrf.mxu0
    %v653 = vadd.f32 %v388, %v652
    %v654 = vpop.f32.mrf.mxu0
    %655 = vmatprep.mubr.f32.mxu0 0.0
    %v656 = vand.u32 %v204, 4294901760
    %657 = vmatmul.mubr.f32.gmra.mxu0 %v656
    %v658 = vpop.f32.mrf.mxu0
    %v659 = vadd.f32 %v398, %v658
    %v660 = vpop.f32.mrf.mxu0
    %661 = vmatprep.mubr.f32.mxu0 0.0
    %v662 = vand.u32 %v205, 4294901760
    %663 = vmatmul.mubr.f32.gmra.mxu0 %v662
    %v664 = vpop.f32.mrf.mxu0
    %v665 = vadd.f32 %v408, %v664
    %v666 = vpop.f32.mrf.mxu0
    %667 = vmatprep.mubr.f32.mxu0 0.0
    %v668 = vand.u32 %v206, 4294901760
    %669 = vmatmul.mubr.f32.gmra.mxu0 %v668
    %v670 = vpop.f32.mrf.mxu0
    %v671 = vadd.f32 %v418, %v670
    %v672 = vpop.f32.mrf.mxu0
    %673 = vmatprep.mubr.f32.mxu0 0.0
    %v674 = vand.u32 %v207, 4294901760
    %675 = vmatmul.mubr.f32.gmra.mxu0 %v674
    %v676 = vpop.f32.mrf.mxu0
    %v677 = vadd.f32 %v428, %v676
    %v678 = vpop.f32.mrf.mxu0
    %679 = vmatprep.mubr.f32.mxu0 0.0
    %v680 = vand.u32 %v208, 4294901760
    %681 = vmatmul.mubr.f32.gmra.mxu0 %v680
    %v682 = vpop.f32.mrf.mxu0
    %v683 = vadd.f32 %v438, %v682
    %v684 = vpop.f32.mrf.mxu0
    %685 = vmatprep.mubr.f32.mxu0 0.0
    %v686 = vand.u32 %v209, 4294901760
    %687 = vmatmul.mubr.f32.gmra.mxu0 %v686
    %v688 = vpop.f32.mrf.mxu0
    %v689 = vadd.f32 %v448, %v688
    %v690 = vpop.f32.mrf.mxu0
    %691 = vdwg.mxu0
    %692 = vmatprep.subr.mxu0 0.0
    %v693 = vand.u32 %v177, 4294901760
    %v694 = vsub.f32 %v177, %v693
    %695 = vmatpush1.msra.mxu0 %v694
    %696 = vmatprep.subr.mxu0 0.0
    %v697 = vand.u32 %v176, 4294901760
    %v698 = vsub.f32 %v176, %v697
    %699 = vmatpush1.msra.mxu0 %v698
    %700 = vmatprep.subr.mxu0 0.0
    %v701 = vand.u32 %v175, 4294901760
    %v702 = vsub.f32 %v175, %v701
    %703 = vmatpush1.msra.mxu0 %v702
    %704 = vmatprep.subr.mxu0 0.0
    %v705 = vand.u32 %v174, 4294901760
    %v706 = vsub.f32 %v174, %v705
    %707 = vmatpush1.msra.mxu0 %v706
    %708 = vmatprep.subr.mxu0 0.0
    %v709 = vand.u32 %v173, 4294901760
    %v710 = vsub.f32 %v173, %v709
    %711 = vmatpush1.msra.mxu0 %v710
    %712 = vmatprep.subr.mxu0 0.0
    %v713 = vand.u32 %v172, 4294901760
    %v714 = vsub.f32 %v172, %v713
    %715 = vmatpush1.msra.mxu0 %v714
    %716 = vmatprep.subr.mxu0 0.0
    %v717 = vand.u32 %v171, 4294901760
    %v718 = vsub.f32 %v171, %v717
    %719 = vmatpush1.msra.mxu0 %v718
    %720 = vmatprep.subr.mxu0 0.0
    %v721 = vand.u32 %v170, 4294901760
    %v722 = vsub.f32 %v170, %v721
    %723 = vmatpush1.msra.mxu0 %v722
    %724 = vmatprep.subr.mxu0 0.0
    %v725 = vand.u32 %v169, 4294901760
    %v726 = vsub.f32 %v169, %v725
    %727 = vmatpush1.msra.mxu0 %v726
    %728 = vmatprep.subr.mxu0 0.0
    %v729 = vand.u32 %v168, 4294901760
    %v730 = vsub.f32 %v168, %v729
    %731 = vmatpush1.msra.mxu0 %v730
    %732 = vmatprep.subr.mxu0 0.0
    %v733 = vand.u32 %v167, 4294901760
    %v734 = vsub.f32 %v167, %v733
    %735 = vmatpush1.msra.mxu0 %v734
    %736 = vmatprep.subr.mxu0 0.0
    %v737 = vand.u32 %v166, 4294901760
    %v738 = vsub.f32 %v166, %v737
    %739 = vmatpush1.msra.mxu0 %v738
    %740 = vmatprep.subr.mxu0 0.0
    %v741 = vand.u32 %v165, 4294901760
    %v742 = vsub.f32 %v165, %v741
    %743 = vmatpush1.msra.mxu0 %v742
    %744 = vmatprep.subr.mxu0 0.0
    %v745 = vand.u32 %v164, 4294901760
    %v746 = vsub.f32 %v164, %v745
    %747 = vmatpush1.msra.mxu0 %v746
    %748 = vmatprep.subr.mxu0 0.0
    %v749 = vand.u32 %v163, 4294901760
    %v750 = vsub.f32 %v163, %v749
    %751 = vmatpush1.msra.mxu0 %v750
    %752 = vmatprep.subr.mxu0 0.0
    %v753 = vand.u32 %v162, 4294901760
    %v754 = vsub.f32 %v162, %v753
    %755 = vmatpush1.msra.mxu0 %v754
    %756 = vmatprep.subr.mxu0 0.0
    %757 = vmatpush2.msra.mxu0 0.0
    %758 = vmatprep.subr.mxu0 0.0
    %759 = vmatpush2.msra.mxu0 0.0
    %760 = vmatprep.subr.mxu0 0.0
    %761 = vmatpush2.msra.mxu0 0.0
    %762 = vmatprep.subr.mxu0 0.0
    %763 = vmatpush2.msra.mxu0 0.0
    %764 = vmatprep.subr.mxu0 0.0
    %765 = vmatpush2.msra.mxu0 0.0
    %766 = vmatprep.subr.mxu0 0.0
    %767 = vmatpush2.msra.mxu0 0.0
    %768 = vmatprep.subr.mxu0 0.0
    %769 = vmatpush2.msra.mxu0 0.0
    %770 = vmatprep.subr.mxu0 0.0
    %771 = vmatpush2.msra.mxu0 0.0
    %772 = vmatprep.subr.mxu0 0.0
    %773 = vmatpush2.msra.mxu0 0.0
    %774 = vmatprep.subr.mxu0 0.0
    %775 = vmatpush2.msra.mxu0 0.0
    %776 = vmatprep.subr.mxu0 0.0
    %777 = vmatpush2.msra.mxu0 0.0
    %778 = vmatprep.subr.mxu0 0.0
    %779 = vmatpush2.msra.mxu0 0.0
    %780 = vmatprep.subr.mxu0 0.0
    %781 = vmatpush2.msra.mxu0 0.0
    %782 = vmatprep.subr.mxu0 0.0
    %783 = vmatpush2.msra.mxu0 0.0
    %784 = vmatprep.subr.mxu0 0.0
    %785 = vmatpush2.msra.mxu0 0.0
    %786 = vmatprep.subr.mxu0 0.0
    %787 = vmatpush2.msra.mxu0 0.0
    %788 = vmatprep.mubr.f32.mxu0 0.0
    %v789 = vand.u32 %v194, 4294901760
    %v790 = vsub.f32 %v194, %v789
    %791 = vmatmul.mubr.f32.gmra.mxu0 %v790
    %v792 = vpop.f32.mrf.mxu0
    %v793 = vadd.f32 %v599, %v792
    %v794 = vpop.f32.mrf.mxu0
    %795 = vmatprep.mubr.f32.mxu0 0.0
    %v796 = vand.u32 %v195, 4294901760
    %v797 = vsub.f32 %v195, %v796
    %798 = vmatmul.mubr.f32.gmra.mxu0 %v797
    %v799 = vpop.f32.mrf.mxu0
    %v800 = vadd.f32 %v605, %v799
    %v801 = vpop.f32.mrf.mxu0
    %802 = vmatprep.mubr.f32.mxu0 0.0
    %v803 = vand.u32 %v196, 4294901760
    %v804 = vsub.f32 %v196, %v803
    %805 = vmatmul.mubr.f32.gmra.mxu0 %v804
    %v806 = vpop.f32.mrf.mxu0
    %v807 = vadd.f32 %v611, %v806
    %v808 = vpop.f32.mrf.mxu0
    %809 = vmatprep.mubr.f32.mxu0 0.0
    %v810 = vand.u32 %v197, 4294901760
    %v811 = vsub.f32 %v197, %v810
    %812 = vmatmul.mubr.f32.gmra.mxu0 %v811
    %v813 = vpop.f32.mrf.mxu0
    %v814 = vadd.f32 %v617, %v813
    %v815 = vpop.f32.mrf.mxu0
    %816 = vmatprep.mubr.f32.mxu0 0.0
    %v817 = vand.u32 %v198, 4294901760
    %v818 = vsub.f32 %v198, %v817
    %819 = vmatmul.mubr.f32.gmra.mxu0 %v818
    %v820 = vpop.f32.mrf.mxu0
    %v821 = vadd.f32 %v623, %v820
    %v822 = vpop.f32.mrf.mxu0
    %823 = vmatprep.mubr.f32.mxu0 0.0
    %v824 = vand.u32 %v199, 4294901760
    %v825 = vsub.f32 %v199, %v824
    %826 = vmatmul.mubr.f32.gmra.mxu0 %v825
    %v827 = vpop.f32.mrf.mxu0
    %v828 = vadd.f32 %v629, %v827
    %v829 = vpop.f32.mrf.mxu0
    %830 = vmatprep.mubr.f32.mxu0 0.0
    %v831 = vand.u32 %v200, 4294901760
    %v832 = vsub.f32 %v200, %v831
    %833 = vmatmul.mubr.f32.gmra.mxu0 %v832
    %v834 = vpop.f32.mrf.mxu0
    %v835 = vadd.f32 %v635, %v834
    %v836 = vpop.f32.mrf.mxu0
    %837 = vmatprep.mubr.f32.mxu0 0.0
    %v838 = vand.u32 %v201, 4294901760
    %v839 = vsub.f32 %v201, %v838
    %840 = vmatmul.mubr.f32.gmra.mxu0 %v839
    %v841 = vpop.f32.mrf.mxu0
    %v842 = vadd.f32 %v641, %v841
    %v843 = vpop.f32.mrf.mxu0
    %844 = vmatprep.mubr.f32.mxu0 0.0
    %v845 = vand.u32 %v202, 4294901760
    %v846 = vsub.f32 %v202, %v845
    %847 = vmatmul.mubr.f32.gmra.mxu0 %v846
    %v848 = vpop.f32.mrf.mxu0
    %v849 = vadd.f32 %v647, %v848
    %v850 = vpop.f32.mrf.mxu0
    %851 = vmatprep.mubr.f32.mxu0 0.0
    %v852 = vand.u32 %v203, 4294901760
    %v853 = vsub.f32 %v203, %v852
    %854 = vmatmul.mubr.f32.gmra.mxu0 %v853
    %v855 = vpop.f32.mrf.mxu0
    %v856 = vadd.f32 %v653, %v855
    %v857 = vpop.f32.mrf.mxu0
    %858 = vmatprep.mubr.f32.mxu0 0.0
    %v859 = vand.u32 %v204, 4294901760
    %v860 = vsub.f32 %v204, %v859
    %861 = vmatmul.mubr.f32.gmra.mxu0 %v860
    %v862 = vpop.f32.mrf.mxu0
    %v863 = vadd.f32 %v659, %v862
    %v864 = vpop.f32.mrf.mxu0
    %865 = vmatprep.mubr.f32.mxu0 0.0
    %v866 = vand.u32 %v205, 4294901760
    %v867 = vsub.f32 %v205, %v866
    %868 = vmatmul.mubr.f32.gmra.mxu0 %v867
    %v869 = vpop.f32.mrf.mxu0
    %v870 = vadd.f32 %v665, %v869
    %v871 = vpop.f32.mrf.mxu0
    %872 = vmatprep.mubr.f32.mxu0 0.0
    %v873 = vand.u32 %v206, 4294901760
    %v874 = vsub.f32 %v206, %v873
    %875 = vmatmul.mubr.f32.gmra.mxu0 %v874
    %v876 = vpop.f32.mrf.mxu0
    %v877 = vadd.f32 %v671, %v876
    %v878 = vpop.f32.mrf.mxu0
    %879 = vmatprep.mubr.f32.mxu0 0.0
    %v880 = vand.u32 %v207, 4294901760
    %v881 = vsub.f32 %v207, %v880
    %882 = vmatmul.mubr.f32.gmra.mxu0 %v881
    %v883 = vpop.f32.mrf.mxu0
    %v884 = vadd.f32 %v677, %v883
    %v885 = vpop.f32.mrf.mxu0
    %886 = vmatprep.mubr.f32.mxu0 0.0
    %v887 = vand.u32 %v208, 4294901760
    %v888 = vsub.f32 %v208, %v887
    %889 = vmatmul.mubr.f32.gmra.mxu0 %v888
    %v890 = vpop.f32.mrf.mxu0
    %v891 = vadd.f32 %v683, %v890
    %v892 = vpop.f32.mrf.mxu0
    %893 = vmatprep.mubr.f32.mxu0 0.0
    %v894 = vand.u32 %v209, 4294901760
    %v895 = vsub.f32 %v209, %v894
    %896 = vmatmul.mubr.f32.gmra.mxu0 %v895
    %v897 = vpop.f32.mrf.mxu0
    %v898 = vadd.f32 %v689, %v897
    %v899 = vpop.f32.mrf.mxu0
    %900 = vdwg.mxu0
    %901 = vmatprep.subr.mxu0 0.0
    %v902 = vand.u32 %v177, 4294901760
    %903 = vmatpush1.msra.mxu0 %v902
    %904 = vmatprep.subr.mxu0 0.0
    %v905 = vand.u32 %v176, 4294901760
    %906 = vmatpush1.msra.mxu0 %v905
    %907 = vmatprep.subr.mxu0 0.0
    %v908 = vand.u32 %v175, 4294901760
    %909 = vmatpush1.msra.mxu0 %v908
    %910 = vmatprep.subr.mxu0 0.0
    %v911 = vand.u32 %v174, 4294901760
    %912 = vmatpush1.msra.mxu0 %v911
    %913 = vmatprep.subr.mxu0 0.0
    %v914 = vand.u32 %v173, 4294901760
    %915 = vmatpush1.msra.mxu0 %v914
    %916 = vmatprep.subr.mxu0 0.0
    %v917 = vand.u32 %v172, 4294901760
    %918 = vmatpush1.msra.mxu0 %v917
    %919 = vmatprep.subr.mxu0 0.0
    %v920 = vand.u32 %v171, 4294901760
    %921 = vmatpush1.msra.mxu0 %v920
    %922 = vmatprep.subr.mxu0 0.0
    %v923 = vand.u32 %v170, 4294901760
    %924 = vmatpush1.msra.mxu0 %v923
    %925 = vmatprep.subr.mxu0 0.0
    %v926 = vand.u32 %v169, 4294901760
    %927 = vmatpush1.msra.mxu0 %v926
    %928 = vmatprep.subr.mxu0 0.0
    %v929 = vand.u32 %v168, 4294901760
    %930 = vmatpush1.msra.mxu0 %v929
    %931 = vmatprep.subr.mxu0 0.0
    %v932 = vand.u32 %v167, 4294901760
    %933 = vmatpush1.msra.mxu0 %v932
    %934 = vmatprep.subr.mxu0 0.0
    %v935 = vand.u32 %v166, 4294901760
    %936 = vmatpush1.msra.mxu0 %v935
    %937 = vmatprep.subr.mxu0 0.0
    %v938 = vand.u32 %v165, 4294901760
    %939 = vmatpush1.msra.mxu0 %v938
    %940 = vmatprep.subr.mxu0 0.0
    %v941 = vand.u32 %v164, 4294901760
    %942 = vmatpush1.msra.mxu0 %v941
    %943 = vmatprep.subr.mxu0 0.0
    %v944 = vand.u32 %v163, 4294901760
    %945 = vmatpush1.msra.mxu0 %v944
    %946 = vmatprep.subr.mxu0 0.0
    %v947 = vand.u32 %v162, 4294901760
    %948 = vmatpush1.msra.mxu0 %v947
    %949 = vmatprep.subr.mxu0 0.0
    %950 = vmatpush2.msra.mxu0 0.0
    %951 = vmatprep.subr.mxu0 0.0
    %952 = vmatpush2.msra.mxu0 0.0
    %953 = vmatprep.subr.mxu0 0.0
    %954 = vmatpush2.msra.mxu0 0.0
    %955 = vmatprep.subr.mxu0 0.0
    %956 = vmatpush2.msra.mxu0 0.0
    %957 = vmatprep.subr.mxu0 0.0
    %958 = vmatpush2.msra.mxu0 0.0
    %959 = vmatprep.subr.mxu0 0.0
    %960 = vmatpush2.msra.mxu0 0.0
    %961 = vmatprep.subr.mxu0 0.0
    %962 = vmatpush2.msra.mxu0 0.0
    %963 = vmatprep.subr.mxu0 0.0
    %964 = vmatpush2.msra.mxu0 0.0
    %965 = vmatprep.subr.mxu0 0.0
    %966 = vmatpush2.msra.mxu0 0.0
    %967 = vmatprep.subr.mxu0 0.0
    %968 = vmatpush2.msra.mxu0 0.0
    %969 = vmatprep.subr.mxu0 0.0
    %970 = vmatpush2.msra.mxu0 0.0
    %971 = vmatprep.subr.mxu0 0.0
    %972 = vmatpush2.msra.mxu0 0.0
    %973 = vmatprep.subr.mxu0 0.0
    %974 = vmatpush2.msra.mxu0 0.0
    %975 = vmatprep.subr.mxu0 0.0
    %976 = vmatpush2.msra.mxu0 0.0
    %977 = vmatprep.subr.mxu0 0.0
    %978 = vmatpush2.msra.mxu0 0.0
    %979 = vmatprep.subr.mxu0 0.0
    %980 = vmatpush2.msra.mxu0 0.0
    %981 = vmatprep.mubr.f32.mxu0 0.0
    %v982 = vand.u32 %v194, 4294901760
    %v983 = vsub.f32 %v194, %v982
    %v984 = vand.u32 %v983, 4294901760
    %985 = vmatmul.mubr.f32.gmra.mxu0 %v984
    %v986 = vpop.f32.mrf.mxu0
    %v987 = vadd.f32 %v793, %v986
    %v988 = vpop.f32.mrf.mxu0
    %989 = vmatprep.mubr.f32.mxu0 0.0
    %v990 = vand.u32 %v195, 4294901760
    %v991 = vsub.f32 %v195, %v990
    %v992 = vand.u32 %v991, 4294901760
    %993 = vmatmul.mubr.f32.gmra.mxu0 %v992
    %v994 = vpop.f32.mrf.mxu0
    %v995 = vadd.f32 %v800, %v994
    %v996 = vpop.f32.mrf.mxu0
    %997 = vmatprep.mubr.f32.mxu0 0.0
    %v998 = vand.u32 %v196, 4294901760
    %v999 = vsub.f32 %v196, %v998
    %v1000 = vand.u32 %v999, 4294901760
    %1001 = vmatmul.mubr.f32.gmra.mxu0 %v1000
    %v1002 = vpop.f32.mrf.mxu0
    %v1003 = vadd.f32 %v807, %v1002
    %v1004 = vpop.f32.mrf.mxu0
    %1005 = vmatprep.mubr.f32.mxu0 0.0
    %v1006 = vand.u32 %v197, 4294901760
    %v1007 = vsub.f32 %v197, %v1006
    %v1008 = vand.u32 %v1007, 4294901760
    %1009 = vmatmul.mubr.f32.gmra.mxu0 %v1008
    %v1010 = vpop.f32.mrf.mxu0
    %v1011 = vadd.f32 %v814, %v1010
    %v1012 = vpop.f32.mrf.mxu0
    %1013 = vmatprep.mubr.f32.mxu0 0.0
    %v1014 = vand.u32 %v198, 4294901760
    %v1015 = vsub.f32 %v198, %v1014
    %v1016 = vand.u32 %v1015, 4294901760
    %1017 = vmatmul.mubr.f32.gmra.mxu0 %v1016
    %v1018 = vpop.f32.mrf.mxu0
    %v1019 = vadd.f32 %v821, %v1018
    %v1020 = vpop.f32.mrf.mxu0
    %1021 = vmatprep.mubr.f32.mxu0 0.0
    %v1022 = vand.u32 %v199, 4294901760
    %v1023 = vsub.f32 %v199, %v1022
    %v1024 = vand.u32 %v1023, 4294901760
    %1025 = vmatmul.mubr.f32.gmra.mxu0 %v1024
    %v1026 = vpop.f32.mrf.mxu0
    %v1027 = vadd.f32 %v828, %v1026
    %v1028 = vpop.f32.mrf.mxu0
    %1029 = vmatprep.mubr.f32.mxu0 0.0
    %v1030 = vand.u32 %v200, 4294901760
    %v1031 = vsub.f32 %v200, %v1030
    %v1032 = vand.u32 %v1031, 4294901760
    %1033 = vmatmul.mubr.f32.gmra.mxu0 %v1032
    %v1034 = vpop.f32.mrf.mxu0
    %v1035 = vadd.f32 %v835, %v1034
    %v1036 = vpop.f32.mrf.mxu0
    %1037 = vmatprep.mubr.f32.mxu0 0.0
    %v1038 = vand.u32 %v201, 4294901760
    %v1039 = vsub.f32 %v201, %v1038
    %v1040 = vand.u32 %v1039, 4294901760
    %1041 = vmatmul.mubr.f32.gmra.mxu0 %v1040
    %v1042 = vpop.f32.mrf.mxu0
    %v1043 = vadd.f32 %v842, %v1042
    %v1044 = vpop.f32.mrf.mxu0
    %1045 = vmatprep.mubr.f32.mxu0 0.0
    %v1046 = vand.u32 %v202, 4294901760
    %v1047 = vsub.f32 %v202, %v1046
    %v1048 = vand.u32 %v1047, 4294901760
    %1049 = vmatmul.mubr.f32.gmra.mxu0 %v1048
    %v1050 = vpop.f32.mrf.mxu0
    %v1051 = vadd.f32 %v849, %v1050
    %v1052 = vpop.f32.mrf.mxu0
    %1053 = vmatprep.mubr.f32.mxu0 0.0
    %v1054 = vand.u32 %v203, 4294901760
    %v1055 = vsub.f32 %v203, %v1054
    %v1056 = vand.u32 %v1055, 4294901760
    %1057 = vmatmul.mubr.f32.gmra.mxu0 %v1056
    %v1058 = vpop.f32.mrf.mxu0
    %v1059 = vadd.f32 %v856, %v1058
    %v1060 = vpop.f32.mrf.mxu0
    %1061 = vmatprep.mubr.f32.mxu0 0.0
    %v1062 = vand.u32 %v204, 4294901760
    %v1063 = vsub.f32 %v204, %v1062
    %v1064 = vand.u32 %v1063, 4294901760
    %1065 = vmatmul.mubr.f32.gmra.mxu0 %v1064
    %v1066 = vpop.f32.mrf.mxu0
    %v1067 = vadd.f32 %v863, %v1066
    %v1068 = vpop.f32.mrf.mxu0
    %1069 = vmatprep.mubr.f32.mxu0 0.0
    %v1070 = vand.u32 %v205, 4294901760
    %v1071 = vsub.f32 %v205, %v1070
    %v1072 = vand.u32 %v1071, 4294901760
    %1073 = vmatmul.mubr.f32.gmra.mxu0 %v1072
    %v1074 = vpop.f32.mrf.mxu0
    %v1075 = vadd.f32 %v870, %v1074
    %v1076 = vpop.f32.mrf.mxu0
    %1077 = vmatprep.mubr.f32.mxu0 0.0
    %v1078 = vand.u32 %v206, 4294901760
    %v1079 = vsub.f32 %v206, %v1078
    %v1080 = vand.u32 %v1079, 4294901760
    %1081 = vmatmul.mubr.f32.gmra.mxu0 %v1080
    %v1082 = vpop.f32.mrf.mxu0
    %v1083 = vadd.f32 %v877, %v1082
    %v1084 = vpop.f32.mrf.mxu0
    %1085 = vmatprep.mubr.f32.mxu0 0.0
    %v1086 = vand.u32 %v207, 4294901760
    %v1087 = vsub.f32 %v207, %v1086
    %v1088 = vand.u32 %v1087, 4294901760
    %1089 = vmatmul.mubr.f32.gmra.mxu0 %v1088
    %v1090 = vpop.f32.mrf.mxu0
    %v1091 = vadd.f32 %v884, %v1090
    %v1092 = vpop.f32.mrf.mxu0
    %1093 = vmatprep.mubr.f32.mxu0 0.0
    %v1094 = vand.u32 %v208, 4294901760
    %v1095 = vsub.f32 %v208, %v1094
    %v1096 = vand.u32 %v1095, 4294901760
    %1097 = vmatmul.mubr.f32.gmra.mxu0 %v1096
    %v1098 = vpop.f32.mrf.mxu0
    %v1099 = vadd.f32 %v891, %v1098
    %v1100 = vpop.f32.mrf.mxu0
    %1101 = vmatprep.mubr.f32.mxu0 0.0
    %v1102 = vand.u32 %v209, 4294901760
    %v1103 = vsub.f32 %v209, %v1102
    %v1104 = vand.u32 %v1103, 4294901760
    %1105 = vmatmul.mubr.f32.gmra.mxu0 %v1104
    %v1106 = vpop.f32.mrf.mxu0
    %v1107 = vadd.f32 %v898, %v1106
    %v1108 = vpop.f32.mrf.mxu0
    %1109 = vdwg.mxu0
    %1110 = vmatprep.subr.mxu0 0.0
    %v1111 = vand.u32 %v177, 4294901760
    %v1112 = vsub.f32 %v177, %v1111
    %v1113 = vand.u32 %v1112, 4294901760
    %1114 = vmatpush1.msra.mxu0 %v1113
    %1115 = vmatprep.subr.mxu0 0.0
    %v1116 = vand.u32 %v176, 4294901760
    %v1117 = vsub.f32 %v176, %v1116
    %v1118 = vand.u32 %v1117, 4294901760
    %1119 = vmatpush1.msra.mxu0 %v1118
    %1120 = vmatprep.subr.mxu0 0.0
    %v1121 = vand.u32 %v175, 4294901760
    %v1122 = vsub.f32 %v175, %v1121
    %v1123 = vand.u32 %v1122, 4294901760
    %1124 = vmatpush1.msra.mxu0 %v1123
    %1125 = vmatprep.subr.mxu0 0.0
    %v1126 = vand.u32 %v174, 4294901760
    %v1127 = vsub.f32 %v174, %v1126
    %v1128 = vand.u32 %v1127, 4294901760
    %1129 = vmatpush1.msra.mxu0 %v1128
    %1130 = vmatprep.subr.mxu0 0.0
    %v1131 = vand.u32 %v173, 4294901760
    %v1132 = vsub.f32 %v173, %v1131
    %v1133 = vand.u32 %v1132, 4294901760
    %1134 = vmatpush1.msra.mxu0 %v1133
    %1135 = vmatprep.subr.mxu0 0.0
    %v1136 = vand.u32 %v172, 4294901760
    %v1137 = vsub.f32 %v172, %v1136
    %v1138 = vand.u32 %v1137, 4294901760
    %1139 = vmatpush1.msra.mxu0 %v1138
    %1140 = vmatprep.subr.mxu0 0.0
    %v1141 = vand.u32 %v171, 4294901760
    %v1142 = vsub.f32 %v171, %v1141
    %v1143 = vand.u32 %v1142, 4294901760
    %1144 = vmatpush1.msra.mxu0 %v1143
    %1145 = vmatprep.subr.mxu0 0.0
    %v1146 = vand.u32 %v170, 4294901760
    %v1147 = vsub.f32 %v170, %v1146
    %v1148 = vand.u32 %v1147, 4294901760
    %1149 = vmatpush1.msra.mxu0 %v1148
    %1150 = vmatprep.subr.mxu0 0.0
    %v1151 = vand.u32 %v169, 4294901760
    %v1152 = vsub.f32 %v169, %v1151
    %v1153 = vand.u32 %v1152, 4294901760
    %1154 = vmatpush1.msra.mxu0 %v1153
    %1155 = vmatprep.subr.mxu0 0.0
    %v1156 = vand.u32 %v168, 4294901760
    %v1157 = vsub.f32 %v168, %v1156
    %v1158 = vand.u32 %v1157, 4294901760
    %1159 = vmatpush1.msra.mxu0 %v1158
    %1160 = vmatprep.subr.mxu0 0.0
    %v1161 = vand.u32 %v167, 4294901760
    %v1162 = vsub.f32 %v167, %v1161
    %v1163 = vand.u32 %v1162, 4294901760
    %1164 = vmatpush1.msra.mxu0 %v1163
    %1165 = vmatprep.subr.mxu0 0.0
    %v1166 = vand.u32 %v166, 4294901760
    %v1167 = vsub.f32 %v166, %v1166
    %v1168 = vand.u32 %v1167, 4294901760
    %1169 = vmatpush1.msra.mxu0 %v1168
    %1170 = vmatprep.subr.mxu0 0.0
    %v1171 = vand.u32 %v165, 4294901760
    %v1172 = vsub.f32 %v165, %v1171
    %v1173 = vand.u32 %v1172, 4294901760
    %1174 = vmatpush1.msra.mxu0 %v1173
    %1175 = vmatprep.subr.mxu0 0.0
    %v1176 = vand.u32 %v164, 4294901760
    %v1177 = vsub.f32 %v164, %v1176
    %v1178 = vand.u32 %v1177, 4294901760
    %1179 = vmatpush1.msra.mxu0 %v1178
    %1180 = vmatprep.subr.mxu0 0.0
    %v1181 = vand.u32 %v163, 4294901760
    %v1182 = vsub.f32 %v163, %v1181
    %v1183 = vand.u32 %v1182, 4294901760
    %1184 = vmatpush1.msra.mxu0 %v1183
    %1185 = vmatprep.subr.mxu0 0.0
    %v1186 = vand.u32 %v162, 4294901760
    %v1187 = vsub.f32 %v162, %v1186
    %v1188 = vand.u32 %v1187, 4294901760
    %1189 = vmatpush1.msra.mxu0 %v1188
    %1190 = vmatprep.subr.mxu0 0.0
    %1191 = vmatpush2.msra.mxu0 0.0
    %1192 = vmatprep.subr.mxu0 0.0
    %1193 = vmatpush2.msra.mxu0 0.0
    %1194 = vmatprep.subr.mxu0 0.0
    %1195 = vmatpush2.msra.mxu0 0.0
    %1196 = vmatprep.subr.mxu0 0.0
    %1197 = vmatpush2.msra.mxu0 0.0
    %1198 = vmatprep.subr.mxu0 0.0
    %1199 = vmatpush2.msra.mxu0 0.0
    %1200 = vmatprep.subr.mxu0 0.0
    %1201 = vmatpush2.msra.mxu0 0.0
    %1202 = vmatprep.subr.mxu0 0.0
    %1203 = vmatpush2.msra.mxu0 0.0
    %1204 = vmatprep.subr.mxu0 0.0
    %1205 = vmatpush2.msra.mxu0 0.0
    %1206 = vmatprep.subr.mxu0 0.0
    %1207 = vmatpush2.msra.mxu0 0.0
    %1208 = vmatprep.subr.mxu0 0.0
    %1209 = vmatpush2.msra.mxu0 0.0
    %1210 = vmatprep.subr.mxu0 0.0
    %1211 = vmatpush2.msra.mxu0 0.0
    %1212 = vmatprep.subr.mxu0 0.0
    %1213 = vmatpush2.msra.mxu0 0.0
    %1214 = vmatprep.subr.mxu0 0.0
    %1215 = vmatpush2.msra.mxu0 0.0
    %1216 = vmatprep.subr.mxu0 0.0
    %1217 = vmatpush2.msra.mxu0 0.0
    %1218 = vmatprep.subr.mxu0 0.0
    %1219 = vmatpush2.msra.mxu0 0.0
    %1220 = vmatprep.subr.mxu0 0.0
    %1221 = vmatpush2.msra.mxu0 0.0
    %1222 = vmatprep.mubr.f32.mxu0 0.0
    %v1223 = vand.u32 %v194, 4294901760
    %1224 = vmatmul.mubr.f32.gmra.mxu0 %v1223
    %v1225 = vpop.f32.mrf.mxu0
    %v1226 = vadd.f32 %v987, %v1225
    %v1227 = vpop.f32.mrf.mxu0
    %1228 = vmatprep.mubr.f32.mxu0 0.0
    %v1229 = vand.u32 %v195, 4294901760
    %1230 = vmatmul.mubr.f32.gmra.mxu0 %v1229
    %v1231 = vpop.f32.mrf.mxu0
    %v1232 = vadd.f32 %v995, %v1231
    %v1233 = vpop.f32.mrf.mxu0
    %1234 = vmatprep.mubr.f32.mxu0 0.0
    %v1235 = vand.u32 %v196, 4294901760
    %1236 = vmatmul.mubr.f32.gmra.mxu0 %v1235
    %v1237 = vpop.f32.mrf.mxu0
    %v1238 = vadd.f32 %v1003, %v1237
    %v1239 = vpop.f32.mrf.mxu0
    %1240 = vmatprep.mubr.f32.mxu0 0.0
    %v1241 = vand.u32 %v197, 4294901760
    %1242 = vmatmul.mubr.f32.gmra.mxu0 %v1241
    %v1243 = vpop.f32.mrf.mxu0
    %v1244 = vadd.f32 %v1011, %v1243
    %v1245 = vpop.f32.mrf.mxu0
    %1246 = vmatprep.mubr.f32.mxu0 0.0
    %v1247 = vand.u32 %v198, 4294901760
    %1248 = vmatmul.mubr.f32.gmra.mxu0 %v1247
    %v1249 = vpop.f32.mrf.mxu0
    %v1250 = vadd.f32 %v1019, %v1249
    %v1251 = vpop.f32.mrf.mxu0
    %1252 = vmatprep.mubr.f32.mxu0 0.0
    %v1253 = vand.u32 %v199, 4294901760
    %1254 = vmatmul.mubr.f32.gmra.mxu0 %v1253
    %v1255 = vpop.f32.mrf.mxu0
    %v1256 = vadd.f32 %v1027, %v1255
    %v1257 = vpop.f32.mrf.mxu0
    %1258 = vmatprep.mubr.f32.mxu0 0.0
    %v1259 = vand.u32 %v200, 4294901760
    %1260 = vmatmul.mubr.f32.gmra.mxu0 %v1259
    %v1261 = vpop.f32.mrf.mxu0
    %v1262 = vadd.f32 %v1035, %v1261
    %v1263 = vpop.f32.mrf.mxu0
    %1264 = vmatprep.mubr.f32.mxu0 0.0
    %v1265 = vand.u32 %v201, 4294901760
    %1266 = vmatmul.mubr.f32.gmra.mxu0 %v1265
    %v1267 = vpop.f32.mrf.mxu0
    %v1268 = vadd.f32 %v1043, %v1267
    %v1269 = vpop.f32.mrf.mxu0
    %1270 = vmatprep.mubr.f32.mxu0 0.0
    %v1271 = vand.u32 %v202, 4294901760
    %1272 = vmatmul.mubr.f32.gmra.mxu0 %v1271
    %v1273 = vpop.f32.mrf.mxu0
    %v1274 = vadd.f32 %v1051, %v1273
    %v1275 = vpop.f32.mrf.mxu0
    %1276 = vmatprep.mubr.f32.mxu0 0.0
    %v1277 = vand.u32 %v203, 4294901760
    %1278 = vmatmul.mubr.f32.gmra.mxu0 %v1277
    %v1279 = vpop.f32.mrf.mxu0
    %v1280 = vadd.f32 %v1059, %v1279
    %v1281 = vpop.f32.mrf.mxu0
    %1282 = vmatprep.mubr.f32.mxu0 0.0
    %v1283 = vand.u32 %v204, 4294901760
    %1284 = vmatmul.mubr.f32.gmra.mxu0 %v1283
    %v1285 = vpop.f32.mrf.mxu0
    %v1286 = vadd.f32 %v1067, %v1285
    %v1287 = vpop.f32.mrf.mxu0
    %1288 = vmatprep.mubr.f32.mxu0 0.0
    %v1289 = vand.u32 %v205, 4294901760
    %1290 = vmatmul.mubr.f32.gmra.mxu0 %v1289
    %v1291 = vpop.f32.mrf.mxu0
    %v1292 = vadd.f32 %v1075, %v1291
    %v1293 = vpop.f32.mrf.mxu0
    %1294 = vmatprep.mubr.f32.mxu0 0.0
    %v1295 = vand.u32 %v206, 4294901760
    %1296 = vmatmul.mubr.f32.gmra.mxu0 %v1295
    %v1297 = vpop.f32.mrf.mxu0
    %v1298 = vadd.f32 %v1083, %v1297
    %v1299 = vpop.f32.mrf.mxu0
    %1300 = vmatprep.mubr.f32.mxu0 0.0
    %v1301 = vand.u32 %v207, 4294901760
    %1302 = vmatmul.mubr.f32.gmra.mxu0 %v1301
    %v1303 = vpop.f32.mrf.mxu0
    %v1304 = vadd.f32 %v1091, %v1303
    %v1305 = vpop.f32.mrf.mxu0
    %1306 = vmatprep.mubr.f32.mxu0 0.0
    %v1307 = vand.u32 %v208, 4294901760
    %1308 = vmatmul.mubr.f32.gmra.mxu0 %v1307
    %v1309 = vpop.f32.mrf.mxu0
    %v1310 = vadd.f32 %v1099, %v1309
    %v1311 = vpop.f32.mrf.mxu0
    %1312 = vmatprep.mubr.f32.mxu0 0.0
    %v1313 = vand.u32 %v209, 4294901760
    %1314 = vmatmul.mubr.f32.gmra.mxu0 %v1313
    %v1315 = vpop.f32.mrf.mxu0
    %v1316 = vadd.f32 %v1107, %v1315
    %v1317 = vpop.f32.mrf.mxu0
    %1318 = vdwg.mxu0
    %1319 = vmatprep.subr.mxu0 0.0
    %v1320 = vand.u32 %v177, 4294901760
    %1321 = vmatpush1.msra.mxu0 %v1320
    %1322 = vmatprep.subr.mxu0 0.0
    %v1323 = vand.u32 %v176, 4294901760
    %1324 = vmatpush1.msra.mxu0 %v1323
    %1325 = vmatprep.subr.mxu0 0.0
    %v1326 = vand.u32 %v175, 4294901760
    %1327 = vmatpush1.msra.mxu0 %v1326
    %1328 = vmatprep.subr.mxu0 0.0
    %v1329 = vand.u32 %v174, 4294901760
    %1330 = vmatpush1.msra.mxu0 %v1329
    %1331 = vmatprep.subr.mxu0 0.0
    %v1332 = vand.u32 %v173, 4294901760
    %1333 = vmatpush1.msra.mxu0 %v1332
    %1334 = vmatprep.subr.mxu0 0.0
    %v1335 = vand.u32 %v172, 4294901760
    %1336 = vmatpush1.msra.mxu0 %v1335
    %1337 = vmatprep.subr.mxu0 0.0
    %v1338 = vand.u32 %v171, 4294901760
    %1339 = vmatpush1.msra.mxu0 %v1338
    %1340 = vmatprep.subr.mxu0 0.0
    %v1341 = vand.u32 %v170, 4294901760
    %1342 = vmatpush1.msra.mxu0 %v1341
    %1343 = vmatprep.subr.mxu0 0.0
    %v1344 = vand.u32 %v169, 4294901760
    %1345 = vmatpush1.msra.mxu0 %v1344
    %1346 = vmatprep.subr.mxu0 0.0
    %v1347 = vand.u32 %v168, 4294901760
    %1348 = vmatpush1.msra.mxu0 %v1347
    %1349 = vmatprep.subr.mxu0 0.0
    %v1350 = vand.u32 %v167, 4294901760
    %1351 = vmatpush1.msra.mxu0 %v1350
    %1352 = vmatprep.subr.mxu0 0.0
    %v1353 = vand.u32 %v166, 4294901760
    %1354 = vmatpush1.msra.mxu0 %v1353
    %1355 = vmatprep.subr.mxu0 0.0
    %v1356 = vand.u32 %v165, 4294901760
    %1357 = vmatpush1.msra.mxu0 %v1356
    %1358 = vmatprep.subr.mxu0 0.0
    %v1359 = vand.u32 %v164, 4294901760
    %1360 = vmatpush1.msra.mxu0 %v1359
    %1361 = vmatprep.subr.mxu0 0.0
    %v1362 = vand.u32 %v163, 4294901760
    %1363 = vmatpush1.msra.mxu0 %v1362
    %1364 = vmatprep.subr.mxu0 0.0
    %v1365 = vand.u32 %v162, 4294901760
    %1366 = vmatpush1.msra.mxu0 %v1365
    %1367 = vmatprep.subr.mxu0 0.0
    %1368 = vmatpush2.msra.mxu0 0.0
    %1369 = vmatprep.subr.mxu0 0.0
    %1370 = vmatpush2.msra.mxu0 0.0
    %1371 = vmatprep.subr.mxu0 0.0
    %1372 = vmatpush2.msra.mxu0 0.0
    %1373 = vmatprep.subr.mxu0 0.0
    %1374 = vmatpush2.msra.mxu0 0.0
    %1375 = vmatprep.subr.mxu0 0.0
    %1376 = vmatpush2.msra.mxu0 0.0
    %1377 = vmatprep.subr.mxu0 0.0
    %1378 = vmatpush2.msra.mxu0 0.0
    %1379 = vmatprep.subr.mxu0 0.0
    %1380 = vmatpush2.msra.mxu0 0.0
    %1381 = vmatprep.subr.mxu0 0.0
    %1382 = vmatpush2.msra.mxu0 0.0
    %1383 = vmatprep.subr.mxu0 0.0
    %1384 = vmatpush2.msra.mxu0 0.0
    %1385 = vmatprep.subr.mxu0 0.0
    %1386 = vmatpush2.msra.mxu0 0.0
    %1387 = vmatprep.subr.mxu0 0.0
    %1388 = vmatpush2.msra.mxu0 0.0
    %1389 = vmatprep.subr.mxu0 0.0
    %1390 = vmatpush2.msra.mxu0 0.0
    %1391 = vmatprep.subr.mxu0 0.0
    %1392 = vmatpush2.msra.mxu0 0.0
    %1393 = vmatprep.subr.mxu0 0.0
    %1394 = vmatpush2.msra.mxu0 0.0
    %1395 = vmatprep.subr.mxu0 0.0
    %1396 = vmatpush2.msra.mxu0 0.0
    %1397 = vmatprep.subr.mxu0 0.0
    %1398 = vmatpush2.msra.mxu0 0.0
    %1399 = vmatprep.mubr.f32.mxu0 0.0
    %v1400 = vand.u32 %v194, 4294901760
    %1401 = vmatmul.mubr.f32.gmra.mxu0 %v1400
    %v1402 = vpop.f32.mrf.mxu0
    %v1403 = vadd.f32 %v1226, %v1402
    %v1404 = vpop.f32.mrf.mxu0
    %1405 = vmatprep.mubr.f32.mxu0 0.0
    %v1406 = vand.u32 %v195, 4294901760
    %1407 = vmatmul.mubr.f32.gmra.mxu0 %v1406
    %v1408 = vpop.f32.mrf.mxu0
    %v1409 = vadd.f32 %v1232, %v1408
    %v1410 = vpop.f32.mrf.mxu0
    %1411 = vmatprep.mubr.f32.mxu0 0.0
    %v1412 = vand.u32 %v196, 4294901760
    %1413 = vmatmul.mubr.f32.gmra.mxu0 %v1412
    %v1414 = vpop.f32.mrf.mxu0
    %v1415 = vadd.f32 %v1238, %v1414
    %v1416 = vpop.f32.mrf.mxu0
    %1417 = vmatprep.mubr.f32.mxu0 0.0
    %v1418 = vand.u32 %v197, 4294901760
    %1419 = vmatmul.mubr.f32.gmra.mxu0 %v1418
    %v1420 = vpop.f32.mrf.mxu0
    %v1421 = vadd.f32 %v1244, %v1420
    %v1422 = vpop.f32.mrf.mxu0
    %1423 = vmatprep.mubr.f32.mxu0 0.0
    %v1424 = vand.u32 %v198, 4294901760
    %1425 = vmatmul.mubr.f32.gmra.mxu0 %v1424
    %v1426 = vpop.f32.mrf.mxu0
    %v1427 = vadd.f32 %v1250, %v1426
    %v1428 = vpop.f32.mrf.mxu0
    %1429 = vmatprep.mubr.f32.mxu0 0.0
    %v1430 = vand.u32 %v199, 4294901760
    %1431 = vmatmul.mubr.f32.gmra.mxu0 %v1430
    %v1432 = vpop.f32.mrf.mxu0
    %v1433 = vadd.f32 %v1256, %v1432
    %v1434 = vpop.f32.mrf.mxu0
    %1435 = vmatprep.mubr.f32.mxu0 0.0
    %v1436 = vand.u32 %v200, 4294901760
    %1437 = vmatmul.mubr.f32.gmra.mxu0 %v1436
    %v1438 = vpop.f32.mrf.mxu0
    %v1439 = vadd.f32 %v1262, %v1438
    %v1440 = vpop.f32.mrf.mxu0
    %1441 = vmatprep.mubr.f32.mxu0 0.0
    %v1442 = vand.u32 %v201, 4294901760
    %1443 = vmatmul.mubr.f32.gmra.mxu0 %v1442
    %v1444 = vpop.f32.mrf.mxu0
    %v1445 = vadd.f32 %v1268, %v1444
    %v1446 = vpop.f32.mrf.mxu0
    %1447 = vmatprep.mubr.f32.mxu0 0.0
    %v1448 = vand.u32 %v202, 4294901760
    %1449 = vmatmul.mubr.f32.gmra.mxu0 %v1448
    %v1450 = vpop.f32.mrf.mxu0
    %v1451 = vadd.f32 %v1274, %v1450
    %v1452 = vpop.f32.mrf.mxu0
    %1453 = vmatprep.mubr.f32.mxu0 0.0
    %v1454 = vand.u32 %v203, 4294901760
    %1455 = vmatmul.mubr.f32.gmra.mxu0 %v1454
    %v1456 = vpop.f32.mrf.mxu0
    %v1457 = vadd.f32 %v1280, %v1456
    %v1458 = vpop.f32.mrf.mxu0
    %1459 = vmatprep.mubr.f32.mxu0 0.0
    %v1460 = vand.u32 %v204, 4294901760
    %1461 = vmatmul.mubr.f32.gmra.mxu0 %v1460
    %v1462 = vpop.f32.mrf.mxu0
    %v1463 = vadd.f32 %v1286, %v1462
    %v1464 = vpop.f32.mrf.mxu0
    %1465 = vmatprep.mubr.f32.mxu0 0.0
    %v1466 = vand.u32 %v205, 4294901760
    %1467 = vmatmul.mubr.f32.gmra.mxu0 %v1466
    %v1468 = vpop.f32.mrf.mxu0
    %v1469 = vadd.f32 %v1292, %v1468
    %v1470 = vpop.f32.mrf.mxu0
    %1471 = vmatprep.mubr.f32.mxu0 0.0
    %v1472 = vand.u32 %v206, 4294901760
    %1473 = vmatmul.mubr.f32.gmra.mxu0 %v1472
    %v1474 = vpop.f32.mrf.mxu0
    %v1475 = vadd.f32 %v1298, %v1474
    %v1476 = vpop.f32.mrf.mxu0
    %1477 = vmatprep.mubr.f32.mxu0 0.0
    %v1478 = vand.u32 %v207, 4294901760
    %1479 = vmatmul.mubr.f32.gmra.mxu0 %v1478
    %v1480 = vpop.f32.mrf.mxu0
    %v1481 = vadd.f32 %v1304, %v1480
    %v1482 = vpop.f32.mrf.mxu0
    %1483 = vmatprep.mubr.f32.mxu0 0.0
    %v1484 = vand.u32 %v208, 4294901760
    %1485 = vmatmul.mubr.f32.gmra.mxu0 %v1484
    %v1486 = vpop.f32.mrf.mxu0
    %v1487 = vadd.f32 %v1310, %v1486
    %v1488 = vpop.f32.mrf.mxu0
    %1489 = vmatprep.mubr.f32.mxu0 0.0
    %v1490 = vand.u32 %v209, 4294901760
    %1491 = vmatmul.mubr.f32.gmra.mxu0 %v1490
    %v1492 = vpop.f32.mrf.mxu0
    %v1493 = vadd.f32 %v1316, %v1492
    %v1494 = vpop.f32.mrf.mxu0
    %1495 = vdwg.mxu0
    %v1496 = vadd.f32 %v146, %v1403
    %v1497 = vadd.f32 %v147, %v1409
    %v1498 = vadd.f32 %v148, %v1415
    %v1499 = vadd.f32 %v149, %v1421
    %v1500 = vadd.f32 %v150, %v1427
    %v1501 = vadd.f32 %v151, %v1433
    %v1502 = vadd.f32 %v152, %v1439
    %v1503 = vadd.f32 %v153, %v1445
    %v1504 = vadd.f32 %v154, %v1451
    %v1505 = vadd.f32 %v155, %v1457
    %v1506 = vadd.f32 %v156, %v1463
    %v1507 = vadd.f32 %v157, %v1469
    %v1508 = vadd.f32 %v158, %v1475
    %v1509 = vadd.f32 %v159, %v1481
    %v1510 = vadd.f32 %v160, %v1487
    %v1511 = vadd.f32 %v161, %v1493
    %1512 = vst [vmem:[#allocation7] sm:$0xff] %v1496
    %1513 = vst [vmem:[#allocation7 + $0x8] sm:$0xff] %v1497
    %1514 = vst [vmem:[#allocation7 + $0x10] sm:$0xff] %v1498
    %1515 = vst [vmem:[#allocation7 + $0x18] sm:$0xff] %v1499
    %1516 = vst [vmem:[#allocation7 + $0x20] sm:$0xff] %v1500
    %1517 = vst [vmem:[#allocation7 + $0x28] sm:$0xff] %v1501
    %1518 = vst [vmem:[#allocation7 + $0x30] sm:$0xff] %v1502
    %1519 = vst [vmem:[#allocation7 + $0x38] sm:$0xff] %v1503
    %1520 = vst [vmem:[#allocation7 + $0x40] sm:$0xff] %v1504
    %1521 = vst [vmem:[#allocation7 + $0x48] sm:$0xff] %v1505
    %1522 = vst [vmem:[#allocation7 + $0x50] sm:$0xff] %v1506
    %1523 = vst [vmem:[#allocation7 + $0x58] sm:$0xff] %v1507
    %1524 = vst [vmem:[#allocation7 + $0x60] sm:$0xff] %v1508
    %1525 = vst [vmem:[#allocation7 + $0x68] sm:$0xff] %v1509
    %1526 = vst [vmem:[#allocation7 + $0x70] sm:$0xff] %v1510
    %1527 = vst [vmem:[#allocation7 + $0x78] sm:$0xff] %v1511
    // Predicated region
    $region22: #{tpu_custom_call.1} parent=1 // pred_check
      %p1528 = pneg %p38
    $region23: #{tpu_custom_call.1} parent=1 // pred_check_branch
      %1530 = sbr.rel (%p1528) target = $region25
    $region24: #{tpu_custom_call.1} parent=1 // pred_region
      %v1531 = vld [vmem:[#allocation7] sm:$0xff]
      %v1532 = vld [vmem:[#allocation7 + $0x8] sm:$0xff]
      %v1533 = vld [vmem:[#allocation7 + $0x10] sm:$0xff]
      %v1534 = vld [vmem:[#allocation7 + $0x18] sm:$0xff]
      %v1535 = vld [vmem:[#allocation7 + $0x20] sm:$0xff]
      %v1536 = vld [vmem:[#allocation7 + $0x28] sm:$0xff]
      %v1537 = vld [vmem:[#allocation7 + $0x30] sm:$0xff]
      %v1538 = vld [vmem:[#allocation7 + $0x38] sm:$0xff]
      %v1539 = vld [vmem:[#allocation7 + $0x40] sm:$0xff]
      %v1540 = vld [vmem:[#allocation7 + $0x48] sm:$0xff]
      %v1541 = vld [vmem:[#allocation7 + $0x50] sm:$0xff]
      %v1542 = vld [vmem:[#allocation7 + $0x58] sm:$0xff]
      %v1543 = vld [vmem:[#allocation7 + $0x60] sm:$0xff]
      %v1544 = vld [vmem:[#allocation7 + $0x68] sm:$0xff]
      %v1545 = vld [vmem:[#allocation7 + $0x70] sm:$0xff]
      %v1546 = vld [vmem:[#allocation7 + $0x78] sm:$0xff]
      %v1547 = vmul.f32 %v1531, 5.656854
      %v1548 = vmul.f32 %v1532, 5.656854
      %v1549 = vmul.f32 %v1533, 5.656854
      %v1550 = vmul.f32 %v1534, 5.656854
      %v1551 = vmul.f32 %v1535, 5.656854
      %v1552 = vmul.f32 %v1536, 5.656854
      %v1553 = vmul.f32 %v1537, 5.656854
      %v1554 = vmul.f32 %v1538, 5.656854
      %v1555 = vmul.f32 %v1539, 5.656854
      %v1556 = vmul.f32 %v1540, 5.656854
      %v1557 = vmul.f32 %v1541, 5.656854
      %v1558 = vmul.f32 %v1542, 5.656854
      %v1559 = vmul.f32 %v1543, 5.656854
      %v1560 = vmul.f32 %v1544, 5.656854
      %v1561 = vmul.f32 %v1545, 5.656854
      %v1562 = vmul.f32 %v1546, 5.656854
      %1563 = vst [vmem:[#allocation7] sm:$0xff] %v1547
      %1564 = vst [vmem:[#allocation7 + $0x8] sm:$0xff] %v1548
      %1565 = vst [vmem:[#allocation7 + $0x10] sm:$0xff] %v1549
      %1566 = vst [vmem:[#allocation7 + $0x18] sm:$0xff] %v1550
      %1567 = vst [vmem:[#allocation7 + $0x20] sm:$0xff] %v1551
      %1568 = vst [vmem:[#allocation7 + $0x28] sm:$0xff] %v1552
      %1569 = vst [vmem:[#allocation7 + $0x30] sm:$0xff] %v1553
      %1570 = vst [vmem:[#allocation7 + $0x38] sm:$0xff] %v1554
      %1571 = vst [vmem:[#allocation7 + $0x40] sm:$0xff] %v1555
      %1572 = vst [vmem:[#allocation7 + $0x48] sm:$0xff] %v1556
      %1573 = vst [vmem:[#allocation7 + $0x50] sm:$0xff] %v1557
      %1574 = vst [vmem:[#allocation7 + $0x58] sm:$0xff] %v1558
      %1575 = vst [vmem:[#allocation7 + $0x60] sm:$0xff] %v1559
      %1576 = vst [vmem:[#allocation7 + $0x68] sm:$0xff] %v1560
      %1577 = vst [vmem:[#allocation7 + $0x70] sm:$0xff] %v1561
      %1578 = vst [vmem:[#allocation7 + $0x78] sm:$0xff] %v1562
    $region25: #{tpu_custom_call.1} parent=1 // pred_fallthru
      _
    // Predicated region
    $region26: #{tpu_custom_call.1} parent=1 // pred_check
      _
    $region27: #{tpu_custom_call.1} parent=1 // pred_check_branch
      %1580 = sbr.rel (0) target = $region29
    $region28: #{tpu_custom_call.1} parent=1 // pred_region
      %s1582 = ssub.s32 2048, 2048
      %1583 = vsyncadd [#allocation4], %s1582
      %s1584 = sshll.u32 [#allocation7], 4
      %s1585 = int_to_ptr.vmem [resolvable:$true] %s1584
      %1590 = dma.vmem_to_hbm [thread:$0]  %s1585, 2048, %s2, [#allocation4], 128, 128, 8
    $region29: #{tpu_custom_call.1} parent=1 // pred_fallthru
      _
    // Predicated region
    $region30: #{tpu_custom_call.1} parent=1 // pred_check
      _
    $region31: #{tpu_custom_call.1} parent=1 // pred_check_branch
      %1592 = sbr.rel (0) target = $region33
    $region32: #{tpu_custom_call.1} parent=1 // pred_region
      %1593 = dma.done [#allocation4], 2048
    $region33: #{tpu_custom_call.1} parent=1 // pred_fallthru
      _
    %1594 = vsyncpa [#allocation3], 1
    %1595 = vsyncpa [#allocation6], 1
    %1596 = vsyncpa [#allocation4], 1

</llo_original>
